<compile_context>
chip_gen: v7x
topology: tpu7x:2x2x1
jax: 0.10.0
libtpu: 0.0.40
codegen_flags: <defaults>
</compile_context>

<pallas_src>
import math

import numpy as np
import jax
import jax.numpy as jnp
from jax import lax
from jax.experimental import pallas as pl

# ---------------- static config (mirrors the torch module hyper-params) -----
B = 2
C = 1
L = 64
PATCH = 8
NP = L // PATCH              # data tokens per batch element
CP = C * PATCH               # per-patch feature size
DIM = 64                     # transformer width
FF = 128                     # transformer FFN hidden
N_GROUPS = 4
HYPO_IN, HYPO_HID, HYPO_OUT = 2, 16, 4
# hyponet.param_shapes_{t,s,r}: name -> (fan_in + 1, fan_out)
PARAM_SHAPES = {
    "wb0": (HYPO_IN + 1, HYPO_HID),
    "wb1": (HYPO_HID + 1, HYPO_HID),
    "wb2": (HYPO_HID + 1, HYPO_OUT),
}
GROUPS = ("t", "s", "r")     # token order in forward(): t, then s, then r

WTOKEN_RNG = {}
_o = 0
for _nm, _sh in PARAM_SHAPES.items():
    _g = min(N_GROUPS, _sh[1])
    assert _sh[1] % _g == 0
    WTOKEN_RNG[_nm] = (_o, _o + _g)
    _o += _g
N_WTOK_PER_GROUP = _o                                   # 12
N_WTOKENS = len(GROUPS) * N_WTOK_PER_GROUP              # 36
N_SEQ = NP + N_WTOKENS                                  # 44
SEQ_PAD = ((N_SEQ + 7) // 8) * 8                        # 48 (sublane aligned)
TOTAL = B * SEQ_PAD                                     # 96

# lane-dense padded output slab, one per batch element
BASE_ROWS = max(n for n, _ in PARAM_SHAPES.values())    # 17
OUT_ROWS = ((BASE_ROWS + 7) // 8) * 8                   # 24
OUT_COLS = 128

MWCOL_OFF, BASE_OFF = {}, {}
_mw, _bc = 0, 0
for _grp in GROUPS:
    for _nm, (_n, _m) in PARAM_SHAPES.items():
        MWCOL_OFF[(_grp, _nm)] = _mw
        BASE_OFF[(_grp, _nm)] = _bc
        _mw += _n - 1
        _bc += _m
MW_COLS, BASE_COLS = _mw, _bc                           # 102, 108
assert MW_COLS <= OUT_COLS and BASE_COLS <= OUT_COLS and BASE_ROWS <= OUT_ROWS

# ------- packed parameter-slab row offsets (all multiples of 8) --------------
R_WTOK = 0                                 # (SEQ_PAD-NP, 64)  wtokens (+pad rows)
R_TOKW = R_WTOK + (SEQ_PAD - NP)           # (CP, 64)
R_WQ = R_TOKW + CP
R_WK = R_WQ + DIM
R_WV = R_WK + DIM
R_WO = R_WV + DIM
R_W2 = R_WO + DIM                          # (FF, 64)
R_BVEC = R_W2 + FF                         # 10 bias/LN rows (16 alloc)
R_MLNG = R_BVEC + 16                       # (36, 64) postfc LN gammas
R_MLNB = R_MLNG + 40                       # (36, 64) postfc LN betas
W64_ROWS = R_MLNB + 40

R_W1 = 0                                   # (64, 128)
R_MW = R_W1 + DIM                          # (64, 128)  stacked postfc weights
R_MB = R_MW + DIM                          # 1 row      stacked postfc biases
R_BLK = R_MB + 8                           # (36, 128)  block-diag mask
R_ASEL = R_BLK + 40                        # (24, 128)  block-transpose 0/1 select
R_BSEL = R_ASEL + OUT_ROWS                 # (36, 128)  token-replication 0/1 select
R_WBASE = R_BSEL + 40                      # (24, 128)  base weight rows
R_BIASS = R_WBASE + OUT_ROWS               # (24, 128)  base bias rows (additive)
R_B1 = R_BIASS + OUT_ROWS                  # 1 row      FFN bias 1
W128_ROWS = R_B1 + 8


# ---------------- shared math helpers (kernel AND reference) -----------------
def _ln(x, g, b):
    mu = jnp.mean(x, axis=-1, keepdims=True)
    var = jnp.mean((x - mu) ** 2, axis=-1, keepdims=True)
    return (x - mu) * lax.rsqrt(var + 1e-5) * g + b


def _softmax(x):
    m = jnp.max(x, axis=-1, keepdims=True)
    e = jnp.exp(x - m)
    return e / jnp.sum(e, axis=-1, keepdims=True)


def _gelu(x):
    # TODO(synk): PyTorch nn.GELU defaults to the exact erf form; tanh approx used.
    return 0.5 * x * (1.0 + jnp.tanh(0.7978845608028654 * (x + 0.044715 * x * x * x)))


def _mm(a, b):           # (n,k)@(k,m) — bf16 operands, f32 accumulate on the MXU
    return jnp.dot(a.astype(jnp.bfloat16), b.astype(jnp.bfloat16),
                   preferred_element_type=jnp.float32)


def _mm_nt(a, b):        # (n,k)@(m,k)^T -> (n,m), native (1,1)-contraction
    return lax.dot_general(a.astype(jnp.bfloat16), b.astype(jnp.bfloat16),
                           (((1,), (1,)), ((), ())),
                           preferred_element_type=jnp.float32)


# ---------------- the single fused Pallas kernel ------------------------------
def fused_kernel(patches_ref, w64_ref, w128_ref, o_ref):
    # ---- biases / LN params: one aligned 16-row load, then small row views ---
    bvec = w64_ref[R_BVEC:R_BVEC + 16, :]
    rows = [bvec[i:i + 1, :] for i in range(10)]
    tok_b, bq, bk, bv, bo, b2, ln1g, ln1b, ln2g, ln2b = rows

    # ---- tokenizer + sequence assembly (batch folded into sublanes) ----------
    dtok = _mm(patches_ref[...], w64_ref[R_TOKW:R_TOKW + CP, :]) + tok_b     # (B*NP, DIM)
    wtok = w64_ref[R_WTOK:R_WTOK + (SEQ_PAD - NP), :]                        # (40, DIM)
    pieces = []
    for b in range(B):
        pieces.append(dtok[b * NP:(b + 1) * NP])
        pieces.append(wtok)
    x = jnp.concatenate(pieces, axis=0)                                      # (TOTAL, DIM)

    # ---- pre-LN single-head transformer encoder block ------------------------
    h = _ln(x, ln1g, ln1b)
    q = _mm(h, w64_ref[R_WQ:R_WQ + DIM, :]) + bq
    k = _mm(h, w64_ref[R_WK:R_WK + DIM, :]) + bk
    v = _mm(h, w64_ref[R_WV:R_WV + DIM, :]) + bv
    scores = _mm_nt(q, k) * (1.0 / math.sqrt(DIM))                           # (TOTAL, TOTAL)
    r_idx = lax.broadcasted_iota(jnp.int32, (TOTAL, TOTAL), 0)
    c_idx = lax.broadcasted_iota(jnp.int32, (TOTAL, TOTAL), 1)
    mask = None                     # block-diagonal over batch + key-padding mask
    for b in range(B):
        in_seg = (r_idx >= b * SEQ_PAD) & (r_idx < (b + 1) * SEQ_PAD)
        key_ok = (c_idx >= b * SEQ_PAD) & (c_idx < b * SEQ_PAD + N_SEQ)
        term = in_seg & key_ok
        mask = term if mask is None else (mask | term)
    scores = jnp.where(mask, scores, -1e30)
    attn = _softmax(scores)
    o = _mm(attn, v)
    x = x + _mm(o, w64_ref[R_WO:R_WO + DIM, :]) + bo
    h2 = _ln(x, ln2g, ln2b)
    f = _gelu(_mm(h2, w128_ref[R_W1:R_W1 + DIM, :]) + w128_ref[R_B1:R_B1 + 1, :])
    y = x + _mm(f, w64_ref[R_W2:R_W2 + FF, :]) + b2                          # (TOTAL, DIM)

    # ---- hyper-net weight modulation: all 9 (group x name) paths slab-wide ---
    mlng = w64_ref[R_MLNG:R_MLNG + N_WTOKENS, :]
    mlnb = w64_ref[R_MLNB:R_MLNB + N_WTOKENS, :]
    mw = w128_ref[R_MW:R_MW + DIM, :]
    mb = w128_ref[R_MB:R_MB + 1, :]
    blkm = w128_ref[R_BLK:R_BLK + N_WTOKENS, :]
    a_sel = w128_ref[R_ASEL:R_ASEL + OUT_ROWS, :]
    b_sel = w128_ref[R_BSEL:R_BSEL + N_WTOKENS, :]
    wbase = w128_ref[R_WBASE:R_WBASE + OUT_ROWS, :]
    bias_slab = w128_ref[R_BIASS:R_BIASS + OUT_ROWS, :]

    for b in range(B):
        wt = y[b * SEQ_PAD + NP:b * SEQ_PAD + NP + N_WTOKENS, :]             # (36, DIM)
        hmod = _ln(wt, mlng, mlnb)                                           # per-block LN
        proj = (_mm(hmod, mw) + mb) * blkm                # (36, 128) all postfc linears
        # block-transpose (a_sel) + token replication/torch-.repeat (b_sel), both
        # constant 0/1 matrices -> one lane-dense (24, 128) modulation slab
        xrep = _mm(_mm_nt(a_sel, proj), b_sel)                               # (24, 128)
        wmod = wbase * xrep
        inv = lax.rsqrt(jnp.sum(wmod * wmod, axis=0, keepdims=True) + 1e-24)
        o_ref[b, :, :] = wmod * inv + bias_slab           # one full-tile store / batch


# ---------------- pallas_call wrapper ------------------------------------------
def _cost_estimate():
    flops = 2 * (B * NP * CP * DIM
                 + 4 * TOTAL * DIM * DIM
                 + 2 * TOTAL * TOTAL * DIM
                 + 2 * TOTAL * DIM * FF
                 + B * (N_WTOKENS * DIM * OUT_COLS
                        + OUT_ROWS * OUT_COLS * N_WTOKENS
                        + OUT_ROWS * N_WTOKENS * OUT_COLS))
    transcendentals = TOTAL * TOTAL + TOTAL * FF + B * (N_WTOKENS + OUT_COLS)
    bytes_accessed = 4 * (B * NP * CP + W64_ROWS * DIM + W128_ROWS * OUT_COLS
                          + B * OUT_ROWS * OUT_COLS)
    return pl.CostEstimate(flops=flops, transcendentals=transcendentals,
                           bytes_accessed=bytes_accessed)


def fused_forward_pallas(patches2, w64, w128):
    # single kernel invocation; all operands are tiny and live entirely in VMEM
    return pl.pallas_call(
        fused_kernel,
        out_shape=jax.ShapeDtypeStruct((B, OUT_ROWS, OUT_COLS), jnp.float32),
        cost_estimate=_cost_estimate(),
    )(patches2, w64, w128)


# ---------------- forward pass (Pallas) ----------------------------------------
@jax.jit
def forward(data, pk):
    patches = data.reshape(B, C, NP, PATCH).transpose(0, 2, 1, 3).reshape(B * NP, CP)
    slab = fused_forward_pallas(patches, pk["w64"], pk["w128"])   # (B, 24, 128)
    out = {}
    for grp in GROUPS:
        out[grp] = {}
        for name, (n, m) in PARAM_SHAPES.items():
            c = BASE_OFF[(grp, name)]
            out[grp][name] = slab[:, :n, c:c + m]
    # TODO(synk): hyponet.set_params(...) / returning the hyponet nn.Module has no
    # tensor semantics; the generated (params_t, params_s, params_r) are returned.
    return out


# ---------------- parameter packing (done once, outside forward) ---------------
def pack_params(p):
    f32 = jnp.float32
    # ------- width-64 slab -------
    w64 = jnp.zeros((W64_ROWS, DIM), f32)
    w64 = w64.at[R_WTOK:R_WTOK + N_WTOKENS].set(p["wtokens"])
    w64 = w64.at[R_TOKW:R_TOKW + CP].set(p["tok_w"])
    w64 = w64.at[R_WQ:R_WQ + DIM].set(p["wq"])
    w64 = w64.at[R_WK:R_WK + DIM].set(p["wk"])
    w64 = w64.at[R_WV:R_WV + DIM].set(p["wv"])
    w64 = w64.at[R_WO:R_WO + DIM].set(p["wo"])
    w64 = w64.at[R_W2:R_W2 + FF].set(p["w2"])
    for i, nm in enumerate(("tok_b", "bq", "bk", "bv", "bo", "b2",
                            "ln1g", "ln1b", "ln2g", "ln2b")):
        w64 = w64.at[R_BVEC + i].set(p[nm][0])
    lng, lnb = [], []
    for grp in GROUPS:
        for name, (n, m) in PARAM_SHAPES.items():
            l, r = WTOKEN_RNG[name]
            g = r - l
            pp = p[f"{grp}_{name}"]
            lng.append(jnp.broadcast_to(pp["lng"], (g, DIM)))
            lnb.append(jnp.broadcast_to(pp["lnb"], (g, DIM)))
    w64 = w64.at[R_MLNG:R_MLNG + N_WTOKENS].set(jnp.concatenate(lng, 0))
    w64 = w64.at[R_MLNB:R_MLNB + N_WTOKENS].set(jnp.concatenate(lnb, 0))

    # ------- width-128 slab -------
    w128 = jnp.zeros((W128_ROWS, OUT_COLS), f32)
    w128 = w128.at[R_W1:R_W1 + DIM].set(p["w1"])
    w128 = w128.at[R_B1].set(p["b1"][0])
    mw = jnp.zeros((DIM, OUT_COLS), f32)
    mb = jnp.zeros((OUT_COLS,), f32)
    wbase = jnp.zeros((OUT_ROWS, OUT_COLS), f32)
    bias_slab = jnp.zeros((OUT_ROWS, OUT_COLS), f32)
    blkm = np.zeros((N_WTOKENS, OUT_COLS), np.float32)
    a_sel = np.zeros((OUT_ROWS, OUT_COLS), np.float32)
    b_sel = np.zeros((N_WTOKENS, OUT_COLS), np.float32)
    for gi, grp in enumerate(GROUPS):
        for name, (n, m) in PARAM_SHAPES.items():
            pp = p[f"{grp}_{name}"]
            nm1 = n - 1
            l, r = WTOKEN_RNG[name]
            g = r - l
            tok0 = gi * N_WTOK_PER_GROUP + l
            mwc = MWCOL_OFF[(grp, name)]
            bc = BASE_OFF[(grp, name)]
            mw = mw.at[:, mwc:mwc + nm1].set(pp["w"])
            mb = mb.at[mwc:mwc + nm1].set(pp["b"][:, 0])
            wbase = wbase.at[0:nm1, bc:bc + m].set(pp["base"][0:nm1])
            bias_slab = bias_slab.at[nm1, bc:bc + m].set(pp["base"][nm1])
            blkm[tok0:tok0 + g, mwc:mwc + nm1] = 1.0
            for rr in range(nm1):
                a_sel[rr, mwc + rr] = 1.0
            for j in range(m):
                b_sel[tok0 + (j % g), bc + j] = 1.0
    w128 = w128.at[R_MW:R_MW + DIM].set(mw)
    w128 = w128.at[R_MB].set(mb)
    w128 = w128.at[R_BLK:R_BLK + N_WTOKENS].set(jnp.asarray(blkm))
    w128 = w128.at[R_ASEL:R_ASEL + OUT_ROWS].set(jnp.asarray(a_sel))
    w128 = w128.at[R_BSEL:R_BSEL + N_WTOKENS].set(jnp.asarray(b_sel))
    w128 = w128.at[R_WBASE:R_WBASE + OUT_ROWS].set(wbase)
    w128 = w128.at[R_BIASS:R_BIASS + OUT_ROWS].set(bias_slab)
    return dict(w64=w64, w128=w128)


# ---------------- pure-JAX reference (faithful per-batch math) ------------------
def reference(data, p):
    bf16, f32 = jnp.bfloat16, jnp.float32

    def em(a, b):
        return jnp.einsum("...k,km->...m", a.astype(bf16), b.astype(bf16),
                          preferred_element_type=f32)

    patches = data.reshape(B, C, NP, PATCH).transpose(0, 2, 1, 3).reshape(B, NP, CP)
    dt = em(patches, p["tok_w"]) + p["tok_b"]
    wt = jnp.broadcast_to(p["wtokens"][None], (B, N_WTOKENS, DIM))
    x = jnp.concatenate([dt, wt], axis=1)
    h = _ln(x, p["ln1g"], p["ln1b"])
    q = em(h, p["wq"]) + p["bq"]
    k = em(h, p["wk"]) + p["bk"]
    v = em(h, p["wv"]) + p["bv"]
    sc = jnp.einsum("bqd,bkd->bqk", q.astype(bf16), k.astype(bf16),
                    preferred_element_type=f32) / math.sqrt(DIM)
    a = _softmax(sc)
    o = jnp.einsum("bqk,bkd->bqd", a.astype(bf16), v.astype(bf16),
                   preferred_element_type=f32)
    o = em(o, p["wo"]) + p["bo"]
    x = x + o
    h2 = _ln(x, p["ln2g"], p["ln2b"])
    f = em(_gelu(em(h2, p["w1"]) + p["b1"]), p["w2"]) + p["b2"]
    trans_out = (x + f)[:, NP:, :]
    out = {}
    for gi, grp in enumerate(GROUPS):
        off = gi * N_WTOK_PER_GROUP
        out[grp] = {}
        for name, (n, m) in PARAM_SHAPES.items():
            l, r = WTOKEN_RNG[name]
            pp = p[f"{grp}_{name}"]
            tok = trans_out[:, off + l:off + r, :]
            hh = _ln(tok, pp["lng"], pp["lnb"])
            xlin = em(hh, pp["w"]) + pp["b"][:, 0]
            xT = jnp.swapaxes(xlin, -1, -2)                   # (B, n-1, g)
            w_base = pp["base"][None, :-1, :]
            b_row = jnp.broadcast_to(pp["base"][None, -1:, :], (B, 1, m))
            rep = m // (r - l)
            wmod = w_base * jnp.tile(xT, (1, 1, rep))
            denom = jnp.sqrt(jnp.sum(wmod * wmod, axis=1, keepdims=True))
            wnorm = wmod / jnp.maximum(denom, 1e-12)          # F.normalize(dim=1)
            out[grp][name] = jnp.concatenate([wnorm, b_row], axis=1)
    return out


# ---------------- deterministic parameter init ----------------------------------
def make_params(key):
    ki = iter(jax.random.split(key, 40))

    def uni(k, shape, bound):
        return jax.random.uniform(k, shape, jnp.float32, -bound, bound)

    def lin(k, fin, fout, bias_shape=None):
        kw, kb = jax.random.split(k)
        bound = 1.0 / math.sqrt(fin)
        return uni(kw, (fin, fout), bound), uni(kb, bias_shape or (1, fout), bound)

    p = {}
    p["tok_w"], p["tok_b"] = lin(next(ki), CP, DIM)
    for nm, fin, fout in [("q", DIM, DIM), ("k", DIM, DIM), ("v", DIM, DIM),
                          ("o", DIM, DIM), ("1", DIM, FF), ("2", FF, DIM)]:
        p[f"w{nm}"], p[f"b{nm}"] = lin(next(ki), fin, fout)
    p["ln1g"] = jnp.ones((1, DIM), jnp.float32)
    p["ln1b"] = jnp.zeros((1, DIM), jnp.float32)
    p["ln2g"] = jnp.ones((1, DIM), jnp.float32)
    p["ln2b"] = jnp.zeros((1, DIM), jnp.float32)
    p["wtokens"] = jax.random.normal(next(ki), (N_WTOKENS, DIM), jnp.float32)
    for grp in GROUPS:
        for name, (n, m) in PARAM_SHAPES.items():
            kb_, kl_ = jax.random.split(next(ki))
            bound = 1.0 / math.sqrt(n - 1)                    # kaiming_uniform(a=sqrt(5))
            kbw, kbb = jax.random.split(kb_)
            base = jnp.concatenate([uni(kbw, (n - 1, m), bound),
                                    uni(kbb, (1, m), bound)], axis=0)   # init_wb
            lw, lb = lin(kl_, DIM, n - 1, bias_shape=(n - 1, 1))
            p[f"{grp}_{name}"] = dict(base=base,
                                      lng=jnp.ones((1, DIM), jnp.float32),
                                      lnb=jnp.zeros((1, DIM), jnp.float32),
                                      w=lw, b=lb)
    return p


# ---------------- main -----------------------------------------------------------
if __name__ == "__main__":
    key = jax.random.PRNGKey(0)
    kp, kd = jax.random.split(key)
    params = make_params(kp)
    packed = pack_params(params)
    data = jax.random.normal(kd, (B, C, L), jnp.float32)

    out = jax.block_until_ready(forward(data, packed))
    ref = jax.block_until_ready(reference(data, params))

    for grp in GROUPS:
        for name, (n, m) in PARAM_SHAPES.items():
            a = out[grp][name]
            b_ = ref[grp][name]
            assert a.shape == b_.shape == (B, n, m), (grp, name, a.shape, b_.shape)
            err = float(jnp.max(jnp.abs(a - b_)))
            assert bool(jnp.allclose(a, b_, atol=2e-2, rtol=2e-2)), (grp, name, err)
    print("KERNEL_OK")
</pallas_src>

<mosaic_0001>
module attributes {stable_mosaic.version = 11 : i64} {
  func.func @fused_kernel(%arg0: memref<16x8xf32, #tpu.memory_space<vmem>>, %arg1: memref<528x64xf32, #tpu.memory_space<vmem>>, %arg2: memref<296x128xf32, #tpu.memory_space<vmem>>, %arg3: memref<2x24x128xf32, #tpu.memory_space<vmem>>) attributes {dimension_semantics = [], scalar_prefetch = 0 : i64, scratch_operands = 0 : i64, tpu.core_type = #tpu.core_type<tc>} {
    %c432 = arith.constant 432 : index
    %c0 = arith.constant 0 : index
    %0 = vector.load %arg1[%c432, %c0] : memref<528x64xf32, #tpu.memory_space<vmem>>, vector<16x64xf32>
    %1 = vector.extract_strided_slice %0 {offsets = [0, 0], sizes = [1, 64], strides = [1, 1]} : vector<16x64xf32> to vector<1x64xf32>
    %2 = vector.extract_strided_slice %0 {offsets = [1, 0], sizes = [1, 64], strides = [1, 1]} : vector<16x64xf32> to vector<1x64xf32>
    %3 = vector.extract_strided_slice %0 {offsets = [2, 0], sizes = [1, 64], strides = [1, 1]} : vector<16x64xf32> to vector<1x64xf32>
    %4 = vector.extract_strided_slice %0 {offsets = [3, 0], sizes = [1, 64], strides = [1, 1]} : vector<16x64xf32> to vector<1x64xf32>
    %5 = vector.extract_strided_slice %0 {offsets = [4, 0], sizes = [1, 64], strides = [1, 1]} : vector<16x64xf32> to vector<1x64xf32>
    %6 = vector.extract_strided_slice %0 {offsets = [5, 0], sizes = [1, 64], strides = [1, 1]} : vector<16x64xf32> to vector<1x64xf32>
    %7 = vector.extract_strided_slice %0 {offsets = [6, 0], sizes = [1, 64], strides = [1, 1]} : vector<16x64xf32> to vector<1x64xf32>
    %8 = vector.extract_strided_slice %0 {offsets = [7, 0], sizes = [1, 64], strides = [1, 1]} : vector<16x64xf32> to vector<1x64xf32>
    %9 = vector.extract_strided_slice %0 {offsets = [8, 0], sizes = [1, 64], strides = [1, 1]} : vector<16x64xf32> to vector<1x64xf32>
    %10 = vector.extract_strided_slice %0 {offsets = [9, 0], sizes = [1, 64], strides = [1, 1]} : vector<16x64xf32> to vector<1x64xf32>
    %c0_0 = arith.constant 0 : index
    %c0_1 = arith.constant 0 : index
    %11 = vector.load %arg0[%c0_0, %c0_1] : memref<16x8xf32, #tpu.memory_space<vmem>>, vector<16x8xf32>
    %c40 = arith.constant 40 : index
    %c0_2 = arith.constant 0 : index
    %12 = vector.load %arg1[%c40, %c0_2] : memref<528x64xf32, #tpu.memory_space<vmem>>, vector<8x64xf32>
    %13 = arith.truncf %11 : vector<16x8xf32> to vector<16x8xbf16>
    %14 = arith.truncf %12 : vector<8x64xf32> to vector<8x64xbf16>
    %cst = arith.constant dense<0.000000e+00> : vector<16x64xf32>
    %15 = tpu.matmul %13, %14, %cst {dimension_numbers = #tpu.dot_dimension_numbers<[1], [0], [0], [1], [0, 0, 1, 1], [], []>} : vector<16x8xbf16>, vector<8x64xbf16>, vector<16x64xf32> -> vector<16x64xf32>
    %16 = vector.broadcast %1 : vector<1x64xf32> to vector<16x64xf32>
    %17 = arith.addf %15, %16 : vector<16x64xf32>
    %c0_3 = arith.constant 0 : index
    %c0_4 = arith.constant 0 : index
    %18 = vector.load %arg1[%c0_3, %c0_4] : memref<528x64xf32, #tpu.memory_space<vmem>>, vector<40x64xf32>
    %19 = vector.extract_strided_slice %17 {offsets = [0, 0], sizes = [8, 64], strides = [1, 1]} : vector<16x64xf32> to vector<8x64xf32>
    %20 = vector.extract_strided_slice %17 {offsets = [8, 0], sizes = [8, 64], strides = [1, 1]} : vector<16x64xf32> to vector<8x64xf32>
    %21 = tpu.concatenate %19, %18, %20, %18 in 0 : vector<8x64xf32>, vector<40x64xf32>, vector<8x64xf32>, vector<40x64xf32> -> vector<96x64xf32>
    %cst_5 = arith.constant dense<0.000000e+00> : vector<96xf32>
    %22 = vector.multi_reduction <add>, %21, %cst_5 [1] : vector<96x64xf32> to vector<96xf32>
    %23 = vector.shape_cast %22 : vector<96xf32> to vector<96x1xf32>
    %cst_6 = arith.constant 6.400000e+01 : f32
    %24 = vector.broadcast %cst_6 : f32 to vector<96x1xf32>
    %25 = arith.divf %23, %24 : vector<96x1xf32>
    %26 = vector.broadcast %25 : vector<96x1xf32> to vector<96x64xf32>
    %27 = arith.subf %21, %26 : vector<96x64xf32>
    %28 = arith.mulf %27, %27 : vector<96x64xf32>
    %cst_7 = arith.constant dense<0.000000e+00> : vector<96xf32>
    %29 = vector.multi_reduction <add>, %28, %cst_7 [1] : vector<96x64xf32> to vector<96xf32>
    %30 = vector.shape_cast %29 : vector<96xf32> to vector<96x1xf32>
    %cst_8 = arith.constant 6.400000e+01 : f32
    %31 = vector.broadcast %cst_8 : f32 to vector<96x1xf32>
    %32 = arith.divf %30, %31 : vector<96x1xf32>
    %33 = vector.broadcast %25 : vector<96x1xf32> to vector<96x64xf32>
    %34 = arith.subf %21, %33 : vector<96x64xf32>
    %cst_9 = arith.constant 9.99999974E-6 : f32
    %35 = vector.broadcast %cst_9 : f32 to vector<96x1xf32>
    %36 = arith.addf %32, %35 : vector<96x1xf32>
    %37 = math.rsqrt %36 : vector<96x1xf32>
    %38 = vector.broadcast %37 : vector<96x1xf32> to vector<96x64xf32>
    %39 = arith.mulf %34, %38 : vector<96x64xf32>
    %40 = vector.broadcast %7 : vector<1x64xf32> to vector<96x64xf32>
    %41 = arith.mulf %39, %40 : vector<96x64xf32>
    %42 = vector.broadcast %8 : vector<1x64xf32> to vector<96x64xf32>
    %43 = arith.addf %41, %42 : vector<96x64xf32>
    %c48 = arith.constant 48 : index
    %c0_10 = arith.constant 0 : index
    %44 = vector.load %arg1[%c48, %c0_10] : memref<528x64xf32, #tpu.memory_space<vmem>>, vector<64x64xf32>
    %45 = arith.truncf %43 : vector<96x64xf32> to vector<96x64xbf16>
    %46 = arith.truncf %44 : vector<64x64xf32> to vector<64x64xbf16>
    %cst_11 = arith.constant dense<0.000000e+00> : vector<96x64xf32>
    %47 = tpu.matmul %45, %46, %cst_11 {dimension_numbers = #tpu.dot_dimension_numbers<[1], [0], [0], [1], [0, 0, 1, 1], [], []>} : vector<96x64xbf16>, vector<64x64xbf16>, vector<96x64xf32> -> vector<96x64xf32>
    %48 = vector.broadcast %2 : vector<1x64xf32> to vector<96x64xf32>
    %49 = arith.addf %47, %48 : vector<96x64xf32>
    %c112 = arith.constant 112 : index
    %c0_12 = arith.constant 0 : index
    %50 = vector.load %arg1[%c112, %c0_12] : memref<528x64xf32, #tpu.memory_space<vmem>>, vector<64x64xf32>
    %51 = arith.truncf %43 : vector<96x64xf32> to vector<96x64xbf16>
    %52 = arith.truncf %50 : vector<64x64xf32> to vector<64x64xbf16>
    %cst_13 = arith.constant dense<0.000000e+00> : vector<96x64xf32>
    %53 = tpu.matmul %51, %52, %cst_13 {dimension_numbers = #tpu.dot_dimension_numbers<[1], [0], [0], [1], [0, 0, 1, 1], [], []>} : vector<96x64xbf16>, vector<64x64xbf16>, vector<96x64xf32> -> vector<96x64xf32>
    %54 = vector.broadcast %3 : vector<1x64xf32> to vector<96x64xf32>
    %55 = arith.addf %53, %54 : vector<96x64xf32>
    %c176 = arith.constant 176 : index
    %c0_14 = arith.constant 0 : index
    %56 = vector.load %arg1[%c176, %c0_14] : memref<528x64xf32, #tpu.memory_space<vmem>>, vector<64x64xf32>
    %57 = arith.truncf %43 : vector<96x64xf32> to vector<96x64xbf16>
    %58 = arith.truncf %56 : vector<64x64xf32> to vector<64x64xbf16>
    %cst_15 = arith.constant dense<0.000000e+00> : vector<96x64xf32>
    %59 = tpu.matmul %57, %58, %cst_15 {dimension_numbers = #tpu.dot_dimension_numbers<[1], [0], [0], [1], [0, 0, 1, 1], [], []>} : vector<96x64xbf16>, vector<64x64xbf16>, vector<96x64xf32> -> vector<96x64xf32>
    %60 = vector.broadcast %4 : vector<1x64xf32> to vector<96x64xf32>
    %61 = arith.addf %59, %60 : vector<96x64xf32>
    %62 = arith.truncf %49 : vector<96x64xf32> to vector<96x64xbf16>
    %63 = arith.truncf %55 : vector<96x64xf32> to vector<96x64xbf16>
    %cst_16 = arith.constant dense<0.000000e+00> : vector<96x96xf32>
    %64 = tpu.matmul %62, %63, %cst_16 {dimension_numbers = #tpu.dot_dimension_numbers<[1], [1], [0], [0], [0, 0, 1, 0], [], []>} : vector<96x64xbf16>, vector<96x64xbf16>, vector<96x96xf32> -> vector<96x96xf32>
    %cst_17 = arith.constant 1.250000e-01 : f32
    %65 = vector.broadcast %cst_17 : f32 to vector<96x96xf32>
    %66 = arith.mulf %64, %65 : vector<96x96xf32>
    %67 = tpu.iota {dimensions = array<i32: 0>} : vector<96x96xi32>
    %68 = tpu.iota {dimensions = array<i32: 1>} : vector<96x96xi32>
    %c0_i32 = arith.constant 0 : i32
    %69 = vector.broadcast %c0_i32 : i32 to vector<96x96xi32>
    %70 = arith.cmpi sge, %67, %69 : vector<96x96xi32>
    %c48_i32 = arith.constant 48 : i32
    %71 = vector.broadcast %c48_i32 : i32 to vector<96x96xi32>
    %72 = arith.cmpi slt, %67, %71 : vector<96x96xi32>
    %73 = arith.andi %70, %72 : vector<96x96xi1>
    %c0_i32_18 = arith.constant 0 : i32
    %74 = vector.broadcast %c0_i32_18 : i32 to vector<96x96xi32>
    %75 = arith.cmpi sge, %68, %74 : vector<96x96xi32>
    %c44_i32 = arith.constant 44 : i32
    %76 = vector.broadcast %c44_i32 : i32 to vector<96x96xi32>
    %77 = arith.cmpi slt, %68, %76 : vector<96x96xi32>
    %78 = arith.andi %75, %77 : vector<96x96xi1>
    %79 = arith.andi %73, %78 : vector<96x96xi1>
    %c48_i32_19 = arith.constant 48 : i32
    %80 = vector.broadcast %c48_i32_19 : i32 to vector<96x96xi32>
    %81 = arith.cmpi sge, %67, %80 : vector<96x96xi32>
    %c96_i32 = arith.constant 96 : i32
    %82 = vector.broadcast %c96_i32 : i32 to vector<96x96xi32>
    %83 = arith.cmpi slt, %67, %82 : vector<96x96xi32>
    %84 = arith.andi %81, %83 : vector<96x96xi1>
    %c48_i32_20 = arith.constant 48 : i32
    %85 = vector.broadcast %c48_i32_20 : i32 to vector<96x96xi32>
    %86 = arith.cmpi sge, %68, %85 : vector<96x96xi32>
    %c92_i32 = arith.constant 92 : i32
    %87 = vector.broadcast %c92_i32 : i32 to vector<96x96xi32>
    %88 = arith.cmpi slt, %68, %87 : vector<96x96xi32>
    %89 = arith.andi %86, %88 : vector<96x96xi1>
    %90 = arith.andi %84, %89 : vector<96x96xi1>
    %91 = arith.ori %79, %90 : vector<96x96xi1>
    %cst_21 = arith.constant -1.000000e+30 : f32
    %92 = vector.broadcast %cst_21 : f32 to vector<96x96xf32>
    %93 = arith.select %91, %66, %92 : vector<96x96xi1>, vector<96x96xf32>
    %cst_22 = arith.constant dense<0xFF800000> : vector<96xf32>
    %94 = vector.multi_reduction <maximumf>, %93, %cst_22 [1] : vector<96x96xf32> to vector<96xf32>
    %95 = vector.shape_cast %94 : vector<96xf32> to vector<96x1xf32>
    %96 = vector.broadcast %95 : vector<96x1xf32> to vector<96x96xf32>
    %97 = arith.subf %93, %96 : vector<96x96xf32>
    %98 = math.exp %97 : vector<96x96xf32>
    %cst_23 = arith.constant dense<0.000000e+00> : vector<96xf32>
    %99 = vector.multi_reduction <add>, %98, %cst_23 [1] : vector<96x96xf32> to vector<96xf32>
    %100 = vector.shape_cast %99 : vector<96xf32> to vector<96x1xf32>
    %101 = vector.broadcast %100 : vector<96x1xf32> to vector<96x96xf32>
    %102 = arith.divf %98, %101 : vector<96x96xf32>
    %103 = arith.truncf %102 : vector<96x96xf32> to vector<96x96xbf16>
    %104 = arith.truncf %61 : vector<96x64xf32> to vector<96x64xbf16>
    %cst_24 = arith.constant dense<0.000000e+00> : vector<96x64xf32>
    %105 = tpu.matmul %103, %104, %cst_24 {dimension_numbers = #tpu.dot_dimension_numbers<[1], [0], [0], [1], [0, 0, 1, 1], [], []>} : vector<96x96xbf16>, vector<96x64xbf16>, vector<96x64xf32> -> vector<96x64xf32>
    %c240 = arith.constant 240 : index
    %c0_25 = arith.constant 0 : index
    %106 = vector.load %arg1[%c240, %c0_25] : memref<528x64xf32, #tpu.memory_space<vmem>>, vector<64x64xf32>
    %107 = arith.truncf %105 : vector<96x64xf32> to vector<96x64xbf16>
    %108 = arith.truncf %106 : vector<64x64xf32> to vector<64x64xbf16>
    %cst_26 = arith.constant dense<0.000000e+00> : vector<96x64xf32>
    %109 = tpu.matmul %107, %108, %cst_26 {dimension_numbers = #tpu.dot_dimension_numbers<[1], [0], [0], [1], [0, 0, 1, 1], [], []>} : vector<96x64xbf16>, vector<64x64xbf16>, vector<96x64xf32> -> vector<96x64xf32>
    %110 = arith.addf %21, %109 : vector<96x64xf32>
    %111 = vector.broadcast %5 : vector<1x64xf32> to vector<96x64xf32>
    %112 = arith.addf %110, %111 : vector<96x64xf32>
    %cst_27 = arith.constant dense<0.000000e+00> : vector<96xf32>
    %113 = vector.multi_reduction <add>, %112, %cst_27 [1] : vector<96x64xf32> to vector<96xf32>
    %114 = vector.shape_cast %113 : vector<96xf32> to vector<96x1xf32>
    %cst_28 = arith.constant 6.400000e+01 : f32
    %115 = vector.broadcast %cst_28 : f32 to vector<96x1xf32>
    %116 = arith.divf %114, %115 : vector<96x1xf32>
    %117 = vector.broadcast %116 : vector<96x1xf32> to vector<96x64xf32>
    %118 = arith.subf %112, %117 : vector<96x64xf32>
    %119 = arith.mulf %118, %118 : vector<96x64xf32>
    %cst_29 = arith.constant dense<0.000000e+00> : vector<96xf32>
    %120 = vector.multi_reduction <add>, %119, %cst_29 [1] : vector<96x64xf32> to vector<96xf32>
    %121 = vector.shape_cast %120 : vector<96xf32> to vector<96x1xf32>
    %cst_30 = arith.constant 6.400000e+01 : f32
    %122 = vector.broadcast %cst_30 : f32 to vector<96x1xf32>
    %123 = arith.divf %121, %122 : vector<96x1xf32>
    %124 = vector.broadcast %116 : vector<96x1xf32> to vector<96x64xf32>
    %125 = arith.subf %112, %124 : vector<96x64xf32>
    %cst_31 = arith.constant 9.99999974E-6 : f32
    %126 = vector.broadcast %cst_31 : f32 to vector<96x1xf32>
    %127 = arith.addf %123, %126 : vector<96x1xf32>
    %128 = math.rsqrt %127 : vector<96x1xf32>
    %129 = vector.broadcast %128 : vector<96x1xf32> to vector<96x64xf32>
    %130 = arith.mulf %125, %129 : vector<96x64xf32>
    %131 = vector.broadcast %9 : vector<1x64xf32> to vector<96x64xf32>
    %132 = arith.mulf %130, %131 : vector<96x64xf32>
    %133 = vector.broadcast %10 : vector<1x64xf32> to vector<96x64xf32>
    %134 = arith.addf %132, %133 : vector<96x64xf32>
    %c0_32 = arith.constant 0 : index
    %c0_33 = arith.constant 0 : index
    %135 = vector.load %arg2[%c0_32, %c0_33] : memref<296x128xf32, #tpu.memory_space<vmem>>, vector<64x128xf32>
    %136 = arith.truncf %134 : vector<96x64xf32> to vector<96x64xbf16>
    %137 = arith.truncf %135 : vector<64x128xf32> to vector<64x128xbf16>
    %cst_34 = arith.constant dense<0.000000e+00> : vector<96x128xf32>
    %138 = tpu.matmul %136, %137, %cst_34 {dimension_numbers = #tpu.dot_dimension_numbers<[1], [0], [0], [1], [0, 0, 1, 1], [], []>} : vector<96x64xbf16>, vector<64x128xbf16>, vector<96x128xf32> -> vector<96x128xf32>
    %c288 = arith.constant 288 : index
    %c0_35 = arith.constant 0 : index
    %139 = vector.load %arg2[%c288, %c0_35] : memref<296x128xf32, #tpu.memory_space<vmem>>, vector<1x128xf32>
    %140 = vector.broadcast %139 : vector<1x128xf32> to vector<96x128xf32>
    %141 = arith.addf %138, %140 : vector<96x128xf32>
    %cst_36 = arith.constant 5.000000e-01 : f32
    %142 = vector.broadcast %cst_36 : f32 to vector<96x128xf32>
    %143 = arith.mulf %142, %141 : vector<96x128xf32>
    %cst_37 = arith.constant 4.471500e-02 : f32
    %144 = vector.broadcast %cst_37 : f32 to vector<96x128xf32>
    %145 = arith.mulf %144, %141 : vector<96x128xf32>
    %146 = arith.mulf %145, %141 : vector<96x128xf32>
    %147 = arith.mulf %146, %141 : vector<96x128xf32>
    %148 = arith.addf %141, %147 : vector<96x128xf32>
    %cst_38 = arith.constant 0.797884583 : f32
    %149 = vector.broadcast %cst_38 : f32 to vector<96x128xf32>
    %150 = arith.mulf %149, %148 : vector<96x128xf32>
    %151 = math.tanh %150 : vector<96x128xf32>
    %cst_39 = arith.constant 1.000000e+00 : f32
    %152 = vector.broadcast %cst_39 : f32 to vector<96x128xf32>
    %153 = arith.addf %152, %151 : vector<96x128xf32>
    %154 = arith.mulf %143, %153 : vector<96x128xf32>
    %c304 = arith.constant 304 : index
    %c0_40 = arith.constant 0 : index
    %155 = vector.load %arg1[%c304, %c0_40] : memref<528x64xf32, #tpu.memory_space<vmem>>, vector<128x64xf32>
    %156 = arith.truncf %154 : vector<96x128xf32> to vector<96x128xbf16>
    %157 = arith.truncf %155 : vector<128x64xf32> to vector<128x64xbf16>
    %cst_41 = arith.constant dense<0.000000e+00> : vector<96x64xf32>
    %158 = tpu.matmul %156, %157, %cst_41 {dimension_numbers = #tpu.dot_dimension_numbers<[1], [0], [0], [1], [0, 0, 1, 1], [], []>} : vector<96x128xbf16>, vector<128x64xbf16>, vector<96x64xf32> -> vector<96x64xf32>
    %159 = arith.addf %112, %158 : vector<96x64xf32>
    %160 = vector.broadcast %6 : vector<1x64xf32> to vector<96x64xf32>
    %161 = arith.addf %159, %160 : vector<96x64xf32>
    %c448 = arith.constant 448 : index
    %c0_42 = arith.constant 0 : index
    %162 = vector.load %arg1[%c448, %c0_42] : memref<528x64xf32, #tpu.memory_space<vmem>>, vector<36x64xf32>
    %c488 = arith.constant 488 : index
    %c0_43 = arith.constant 0 : index
    %163 = vector.load %arg1[%c488, %c0_43] : memref<528x64xf32, #tpu.memory_space<vmem>>, vector<36x64xf32>
    %c64 = arith.constant 64 : index
    %c0_44 = arith.constant 0 : index
    %164 = vector.load %arg2[%c64, %c0_44] : memref<296x128xf32, #tpu.memory_space<vmem>>, vector<64x128xf32>
    %c128 = arith.constant 128 : index
    %c0_45 = arith.constant 0 : index
    %165 = vector.load %arg2[%c128, %c0_45] : memref<296x128xf32, #tpu.memory_space<vmem>>, vector<1x128xf32>
    %c136 = arith.constant 136 : index
    %c0_46 = arith.constant 0 : index
    %166 = vector.load %arg2[%c136, %c0_46] : memref<296x128xf32, #tpu.memory_space<vmem>>, vector<36x128xf32>
    %c176_47 = arith.constant 176 : index
    %c0_48 = arith.constant 0 : index
    %167 = vector.load %arg2[%c176_47, %c0_48] : memref<296x128xf32, #tpu.memory_space<vmem>>, vector<24x128xf32>
    %c200 = arith.constant 200 : index
    %c0_49 = arith.constant 0 : index
    %168 = vector.load %arg2[%c200, %c0_49] : memref<296x128xf32, #tpu.memory_space<vmem>>, vector<36x128xf32>
    %c240_50 = arith.constant 240 : index
    %c0_51 = arith.constant 0 : index
    %169 = vector.load %arg2[%c240_50, %c0_51] : memref<296x128xf32, #tpu.memory_space<vmem>>, vector<24x128xf32>
    %c264 = arith.constant 264 : index
    %c0_52 = arith.constant 0 : index
    %170 = vector.load %arg2[%c264, %c0_52] : memref<296x128xf32, #tpu.memory_space<vmem>>, vector<24x128xf32>
    %171 = vector.extract_strided_slice %161 {offsets = [8, 0], sizes = [36, 64], strides = [1, 1]} : vector<96x64xf32> to vector<36x64xf32>
    %cst_53 = arith.constant dense<0.000000e+00> : vector<36xf32>
    %172 = vector.multi_reduction <add>, %171, %cst_53 [1] : vector<36x64xf32> to vector<36xf32>
    %173 = vector.shape_cast %172 : vector<36xf32> to vector<36x1xf32>
    %cst_54 = arith.constant 6.400000e+01 : f32
    %174 = vector.broadcast %cst_54 : f32 to vector<36x1xf32>
    %175 = arith.divf %173, %174 : vector<36x1xf32>
    %176 = vector.broadcast %175 : vector<36x1xf32> to vector<36x64xf32>
    %177 = arith.subf %171, %176 : vector<36x64xf32>
    %178 = arith.mulf %177, %177 : vector<36x64xf32>
    %cst_55 = arith.constant dense<0.000000e+00> : vector<36xf32>
    %179 = vector.multi_reduction <add>, %178, %cst_55 [1] : vector<36x64xf32> to vector<36xf32>
    %180 = vector.shape_cast %179 : vector<36xf32> to vector<36x1xf32>
    %cst_56 = arith.constant 6.400000e+01 : f32
    %181 = vector.broadcast %cst_56 : f32 to vector<36x1xf32>
    %182 = arith.divf %180, %181 : vector<36x1xf32>
    %183 = vector.broadcast %175 : vector<36x1xf32> to vector<36x64xf32>
    %184 = arith.subf %171, %183 : vector<36x64xf32>
    %cst_57 = arith.constant 9.99999974E-6 : f32
    %185 = vector.broadcast %cst_57 : f32 to vector<36x1xf32>
    %186 = arith.addf %182, %185 : vector<36x1xf32>
    %187 = math.rsqrt %186 : vector<36x1xf32>
    %188 = vector.broadcast %187 : vector<36x1xf32> to vector<36x64xf32>
    %189 = arith.mulf %184, %188 : vector<36x64xf32>
    %190 = arith.mulf %189, %162 : vector<36x64xf32>
    %191 = arith.addf %190, %163 : vector<36x64xf32>
    %192 = arith.truncf %191 : vector<36x64xf32> to vector<36x64xbf16>
    %193 = arith.truncf %164 : vector<64x128xf32> to vector<64x128xbf16>
    %cst_58 = arith.constant dense<0.000000e+00> : vector<36x128xf32>
    %194 = tpu.matmul %192, %193, %cst_58 {dimension_numbers = #tpu.dot_dimension_numbers<[1], [0], [0], [1], [0, 0, 1, 1], [], []>} : vector<36x64xbf16>, vector<64x128xbf16>, vector<36x128xf32> -> vector<36x128xf32>
    %195 = vector.broadcast %165 : vector<1x128xf32> to vector<36x128xf32>
    %196 = arith.addf %194, %195 : vector<36x128xf32>
    %197 = arith.mulf %196, %166 : vector<36x128xf32>
    %198 = arith.truncf %167 : vector<24x128xf32> to vector<24x128xbf16>
    %199 = arith.truncf %197 : vector<36x128xf32> to vector<36x128xbf16>
    %cst_59 = arith.constant dense<0.000000e+00> : vector<24x36xf32>
    %200 = tpu.matmul %198, %199, %cst_59 {dimension_numbers = #tpu.dot_dimension_numbers<[1], [1], [0], [0], [0, 0, 1, 0], [], []>} : vector<24x128xbf16>, vector<36x128xbf16>, vector<24x36xf32> -> vector<24x36xf32>
    %201 = arith.truncf %200 : vector<24x36xf32> to vector<24x36xbf16>
    %202 = arith.truncf %168 : vector<36x128xf32> to vector<36x128xbf16>
    %cst_60 = arith.constant dense<0.000000e+00> : vector<24x128xf32>
    %203 = tpu.matmul %201, %202, %cst_60 {dimension_numbers = #tpu.dot_dimension_numbers<[1], [0], [0], [1], [0, 0, 1, 1], [], []>} : vector<24x36xbf16>, vector<36x128xbf16>, vector<24x128xf32> -> vector<24x128xf32>
    %204 = arith.mulf %169, %203 : vector<24x128xf32>
    %205 = arith.mulf %204, %204 : vector<24x128xf32>
    %cst_61 = arith.constant dense<0.000000e+00> : vector<128xf32>
    %206 = vector.multi_reduction <add>, %205, %cst_61 [0] : vector<24x128xf32> to vector<128xf32>
    %207 = vector.shape_cast %206 : vector<128xf32> to vector<1x128xf32>
    %cst_62 = arith.constant 1.000000e-24 : f32
    %208 = vector.broadcast %cst_62 : f32 to vector<1x128xf32>
    %209 = arith.addf %207, %208 : vector<1x128xf32>
    %210 = math.rsqrt %209 : vector<1x128xf32>
    %211 = vector.broadcast %210 : vector<1x128xf32> to vector<24x128xf32>
    %212 = arith.mulf %204, %211 : vector<24x128xf32>
    %213 = arith.addf %212, %170 : vector<24x128xf32>
    %c0_63 = arith.constant 0 : index
    %c0_64 = arith.constant 0 : index
    %c0_65 = arith.constant 0 : index
    %214 = vector.load %arg3[%c0_63, %c0_64, %c0_65] : memref<2x24x128xf32, #tpu.memory_space<vmem>>, vector<1x24x128xf32>
    %215 = vector.shape_cast %214 : vector<1x24x128xf32> to vector<24x128xf32>
    %216 = vector.shape_cast %213 : vector<24x128xf32> to vector<1x24x128xf32>
    tpu.vector_store %arg3[%c0_63, %c0_64, %c0_65], %216 {strides = array<i32>} : memref<2x24x128xf32, #tpu.memory_space<vmem>>, vector<1x24x128xf32>,
    %217 = vector.extract_strided_slice %161 {offsets = [56, 0], sizes = [36, 64], strides = [1, 1]} : vector<96x64xf32> to vector<36x64xf32>
    %cst_66 = arith.constant dense<0.000000e+00> : vector<36xf32>
    %218 = vector.multi_reduction <add>, %217, %cst_66 [1] : vector<36x64xf32> to vector<36xf32>
    %219 = vector.shape_cast %218 : vector<36xf32> to vector<36x1xf32>
    %cst_67 = arith.constant 6.400000e+01 : f32
    %220 = vector.broadcast %cst_67 : f32 to vector<36x1xf32>
    %221 = arith.divf %219, %220 : vector<36x1xf32>
    %222 = vector.broadcast %221 : vector<36x1xf32> to vector<36x64xf32>
    %223 = arith.subf %217, %222 : vector<36x64xf32>
    %224 = arith.mulf %223, %223 : vector<36x64xf32>
    %cst_68 = arith.constant dense<0.000000e+00> : vector<36xf32>
    %225 = vector.multi_reduction <add>, %224, %cst_68 [1] : vector<36x64xf32> to vector<36xf32>
    %226 = vector.shape_cast %225 : vector<36xf32> to vector<36x1xf32>
    %cst_69 = arith.constant 6.400000e+01 : f32
    %227 = vector.broadcast %cst_69 : f32 to vector<36x1xf32>
    %228 = arith.divf %226, %227 : vector<36x1xf32>
    %229 = vector.broadcast %221 : vector<36x1xf32> to vector<36x64xf32>
    %230 = arith.subf %217, %229 : vector<36x64xf32>
    %cst_70 = arith.constant 9.99999974E-6 : f32
    %231 = vector.broadcast %cst_70 : f32 to vector<36x1xf32>
    %232 = arith.addf %228, %231 : vector<36x1xf32>
    %233 = math.rsqrt %232 : vector<36x1xf32>
    %234 = vector.broadcast %233 : vector<36x1xf32> to vector<36x64xf32>
    %235 = arith.mulf %230, %234 : vector<36x64xf32>
    %236 = arith.mulf %235, %162 : vector<36x64xf32>
    %237 = arith.addf %236, %163 : vector<36x64xf32>
    %238 = arith.truncf %237 : vector<36x64xf32> to vector<36x64xbf16>
    %239 = arith.truncf %164 : vector<64x128xf32> to vector<64x128xbf16>
    %cst_71 = arith.constant dense<0.000000e+00> : vector<36x128xf32>
    %240 = tpu.matmul %238, %239, %cst_71 {dimension_numbers = #tpu.dot_dimension_numbers<[1], [0], [0], [1], [0, 0, 1, 1], [], []>} : vector<36x64xbf16>, vector<64x128xbf16>, vector<36x128xf32> -> vector<36x128xf32>
    %241 = vector.broadcast %165 : vector<1x128xf32> to vector<36x128xf32>
    %242 = arith.addf %240, %241 : vector<36x128xf32>
    %243 = arith.mulf %242, %166 : vector<36x128xf32>
    %244 = arith.truncf %167 : vector<24x128xf32> to vector<24x128xbf16>
    %245 = arith.truncf %243 : vector<36x128xf32> to vector<36x128xbf16>
    %cst_72 = arith.constant dense<0.000000e+00> : vector<24x36xf32>
    %246 = tpu.matmul %244, %245, %cst_72 {dimension_numbers = #tpu.dot_dimension_numbers<[1], [1], [0], [0], [0, 0, 1, 0], [], []>} : vector<24x128xbf16>, vector<36x128xbf16>, vector<24x36xf32> -> vector<24x36xf32>
    %247 = arith.truncf %246 : vector<24x36xf32> to vector<24x36xbf16>
    %248 = arith.truncf %168 : vector<36x128xf32> to vector<36x128xbf16>
    %cst_73 = arith.constant dense<0.000000e+00> : vector<24x128xf32>
    %249 = tpu.matmul %247, %248, %cst_73 {dimension_numbers = #tpu.dot_dimension_numbers<[1], [0], [0], [1], [0, 0, 1, 1], [], []>} : vector<24x36xbf16>, vector<36x128xbf16>, vector<24x128xf32> -> vector<24x128xf32>
    %250 = arith.mulf %169, %249 : vector<24x128xf32>
    %251 = arith.mulf %250, %250 : vector<24x128xf32>
    %cst_74 = arith.constant dense<0.000000e+00> : vector<128xf32>
    %252 = vector.multi_reduction <add>, %251, %cst_74 [0] : vector<24x128xf32> to vector<128xf32>
    %253 = vector.shape_cast %252 : vector<128xf32> to vector<1x128xf32>
    %cst_75 = arith.constant 1.000000e-24 : f32
    %254 = vector.broadcast %cst_75 : f32 to vector<1x128xf32>
    %255 = arith.addf %253, %254 : vector<1x128xf32>
    %256 = math.rsqrt %255 : vector<1x128xf32>
    %257 = vector.broadcast %256 : vector<1x128xf32> to vector<24x128xf32>
    %258 = arith.mulf %250, %257 : vector<24x128xf32>
    %259 = arith.addf %258, %170 : vector<24x128xf32>
    %c1 = arith.constant 1 : index
    %c0_76 = arith.constant 0 : index
    %c0_77 = arith.constant 0 : index
    %260 = vector.load %arg3[%c1, %c0_76, %c0_77] : memref<2x24x128xf32, #tpu.memory_space<vmem>>, vector<1x24x128xf32>
    %261 = vector.shape_cast %260 : vector<1x24x128xf32> to vector<24x128xf32>
    %262 = vector.shape_cast %259 : vector<24x128xf32> to vector<1x24x128xf32>
    tpu.vector_store %arg3[%c1, %c0_76, %c0_77], %262 {strides = array<i32>} : memref<2x24x128xf32, #tpu.memory_space<vmem>>, vector<1x24x128xf32>,
    return
  }
}

</mosaic_0001>

<llo_original>
// kernel: forward.1
$region0: #{forward.1}
  #allocation0 [shape = 'u32[]', space=smem, size = 0x4, offset = 0x4, fixed_abs, tag = 'smem constant byte address 0x4 - core index']
  #allocation1 [shape = 'u32[144,128]{1,0:T(1,128)}', space=vmem, size = 0x12000, scoped, tag = 'internal scratch']
  %s0 = inlined_call_operand.vmem [shape: f32[16,8], index: 0, kind: input, shape index: {}]
  %s1 = inlined_call_operand.vmem [shape: f32[528,64], index: 1, kind: input, shape index: {}]
  %s2 = inlined_call_operand.vmem [shape: f32[296,128], index: 2, kind: input, shape index: {}]
  %s3 = inlined_call_operand.vmem [shape: f32[2,24,128], index: 3, kind: output, shape index: {}]
  %s4 = sld [smem:[#allocation0]]
  $region22: #{forward.1} parent=0
    _
  %s6 = ssub.s32 1, %s4
  %s7 = scalar_select 0, %s6, %s4
  // Predicated region
  $region2: #{forward.1} parent=0 // pred_check
    _
  $region3: #{forward.1} parent=0 // pred_check_branch
    %9 = sbr.rel (0) target = $region5
  $region4: #{forward.1} parent=0 // pred_region
    _
  $region5: #{forward.1} parent=0 // pred_fallthru
    _
  // Predicated region
  $region6: #{forward.1} parent=0 // pred_check
    _
  $region7: #{forward.1} parent=0 // pred_check_branch
    %11 = sbr.rel (0) target = $region9
  $region8: #{forward.1} parent=0 // pred_region
    _
  $region9: #{forward.1} parent=0 // pred_fallthru
    _
  // Predicated region
  $region10: #{forward.1} parent=0 // pred_check
    _
  $region11: #{forward.1} parent=0 // pred_check_branch
    %13 = sbr.rel (0) target = $region13
  $region12: #{forward.1} parent=0 // pred_region
    _
  $region13: #{forward.1} parent=0 // pred_fallthru
    _
  %v15 = vld [vmem:[%s1 + $0x1b0] sm:$0xff]
  %v16 = vld [vmem:[%s1 + $0x1b8] sm:$0xff]
  %v17 = vld [vmem:[%s0] sm:$0xff]
  %v18 = vld [vmem:[%s0 + $0x8] sm:$0xff]
  %v19 = vld [vmem:[%s1 + $0x28] sm:$0xff]
  %v20 = vpack.c.bf16 %v18, %v17
  %v21 = vpack.c.bf16 %v19, %v19
  %v22 = vlaneseq
  %v23 = vshrl.u32 %v22, 7
  %v24 = vsub.s32 0, %v23
  %v25 = vrot.slane %v15, %v24
  %vm26 = vcmask 64512
  %v28 = vsel %vm26, %v20, 0
  %vm30 = vcmask 1043456
  %v32 = vsel %vm30, %v21, 0
  %34 = vmatprep.subr.bf16.mxu0 0
  %35 = vmatpush1.bf16.msra.mxu0 %v32
  %36 = vmatprep.subr.bf16.mxu0 0
  %37 = vmatpush1.bf16.msra.mxu0 0
  %38 = vmatprep.subr.bf16.mxu0 0
  %39 = vmatpush1.bf16.msra.mxu0 0
  %40 = vmatprep.subr.bf16.mxu0 0
  %41 = vmatpush1.bf16.msra.mxu0 0
  %42 = vmatprep.subr.bf16.mxu0 0
  %43 = vmatpush1.bf16.msra.mxu0 0
  %44 = vmatprep.subr.bf16.mxu0 0
  %45 = vmatpush1.bf16.msra.mxu0 0
  %46 = vmatprep.subr.bf16.mxu0 0
  %47 = vmatpush1.bf16.msra.mxu0 0
  %48 = vmatprep.subr.bf16.mxu0 0
  %49 = vmatpush1.bf16.msra.mxu0 0
  %50 = vmatprep.subr.bf16.mxu0 0
  %51 = vmatpush1.bf16.msra.mxu0 0
  %52 = vmatprep.subr.bf16.mxu0 0
  %53 = vmatpush1.bf16.msra.mxu0 0
  %54 = vmatprep.subr.bf16.mxu0 0
  %55 = vmatpush1.bf16.msra.mxu0 0
  %56 = vmatprep.subr.bf16.mxu0 0
  %57 = vmatpush1.bf16.msra.mxu0 0
  %58 = vmatprep.subr.bf16.mxu0 0
  %59 = vmatpush1.bf16.msra.mxu0 0
  %60 = vmatprep.subr.bf16.mxu0 0
  %61 = vmatpush1.bf16.msra.mxu0 0
  %62 = vmatprep.subr.bf16.mxu0 0
  %63 = vmatpush1.bf16.msra.mxu0 0
  %64 = vmatprep.subr.bf16.mxu0 0
  %65 = vmatpush1.bf16.msra.mxu0 0
  %66 = vmatprep.mubr.bf16.mxu0 0
  %67 = vmatmul.mubr.bf16.gmra.mrb[0].mxu0 %v28
  %v68 = vpop.f32.mrb[0].mxu0
  %v69 = vadd.f32 %v25, %v68
  %v70 = vpop.f32.mrb[0].mxu0
  %v71 = vpop.f32.mrb[0].mxu0
  %v72 = vadd.f32 %v25, %v71
  %v73 = vpop.f32.mrb[0].mxu0
  %74 = vdwg.mxu0
  %v75 = vld [vmem:[%s1] sm:$0xff]
  %v76 = vld [vmem:[%s1 + $0x8] sm:$0xff]
  %v77 = vld [vmem:[%s1 + $0x10] sm:$0xff]
  %v78 = vld [vmem:[%s1 + $0x18] sm:$0xff]
  %v79 = vld [vmem:[%s1 + $0x20] sm:$0xff]
  %vm80 = vcmask 523264
  %v81 = vsel %vm80, %v69, 0.0
  %82 = vadd.xlane.f32.xlu0 %v81
  %v83 = vpop.xlane.xlu0 %82
  %v84 = vsel %vm80, %v75, 0.0
  %85 = vadd.xlane.f32.xlu0 %v84
  %v86 = vpop.xlane.xlu0 %85
  %v87 = vsel %vm80, %v76, 0.0
  %88 = vadd.xlane.f32.xlu0 %v87
  %v89 = vpop.xlane.xlu0 %88
  %v90 = vsel %vm80, %v77, 0.0
  %91 = vadd.xlane.f32.xlu0 %v90
  %v92 = vpop.xlane.xlu0 %91
  %v93 = vsel %vm80, %v78, 0.0
  %94 = vadd.xlane.f32.xlu0 %v93
  %v95 = vpop.xlane.xlu0 %94
  %v96 = vsel %vm80, %v79, 0.0
  %97 = vadd.xlane.f32.xlu0 %v96
  %v98 = vpop.xlane.xlu0 %97
  %v99 = vsel %vm80, %v72, 0.0
  %100 = vadd.xlane.f32.xlu0 %v99
  %v101 = vpop.xlane.xlu0 %100
  %v102 = vrcp.pop 64.0
  %v103 = vmul.f32 %v83, %v102
  %v104 = vmul.f32 %v86, %v102
  %v105 = vmul.f32 %v89, %v102
  %v106 = vmul.f32 %v92, %v102
  %v107 = vmul.f32 %v95, %v102
  %v108 = vmul.f32 %v98, %v102
  %v109 = vmul.f32 %v101, %v102
  %v110 = vsub.f32 %v69, %v103
  %v111 = vsub.f32 %v75, %v104
  %v112 = vsub.f32 %v76, %v105
  %v113 = vsub.f32 %v77, %v106
  %v114 = vsub.f32 %v78, %v107
  %v115 = vsub.f32 %v79, %v108
  %v116 = vsub.f32 %v72, %v109
  %v117 = vmul.f32 %v110, %v110
  %v118 = vmul.f32 %v111, %v111
  %v119 = vmul.f32 %v112, %v112
  %v120 = vmul.f32 %v113, %v113
  %v121 = vmul.f32 %v114, %v114
  %v122 = vmul.f32 %v115, %v115
  %v123 = vmul.f32 %v116, %v116
  %v124 = vsel %vm80, %v117, 0.0
  %125 = vadd.xlane.f32.xlu0 %v124
  %v126 = vpop.xlane.xlu0 %125
  %v127 = vsel %vm80, %v118, 0.0
  %128 = vadd.xlane.f32.xlu0 %v127
  %v129 = vpop.xlane.xlu0 %128
  %v130 = vsel %vm80, %v119, 0.0
  %131 = vadd.xlane.f32.xlu0 %v130
  %v132 = vpop.xlane.xlu0 %131
  %v133 = vsel %vm80, %v120, 0.0
  %134 = vadd.xlane.f32.xlu0 %v133
  %v135 = vpop.xlane.xlu0 %134
  %v136 = vsel %vm80, %v121, 0.0
  %137 = vadd.xlane.f32.xlu0 %v136
  %v138 = vpop.xlane.xlu0 %137
  %v139 = vsel %vm80, %v122, 0.0
  %140 = vadd.xlane.f32.xlu0 %v139
  %v141 = vpop.xlane.xlu0 %140
  %v142 = vsel %vm80, %v123, 0.0
  %143 = vadd.xlane.f32.xlu0 %v142
  %v144 = vpop.xlane.xlu0 %143
  %v145 = vmul.f32 %v126, %v102
  %v146 = vmul.f32 %v129, %v102
  %v147 = vmul.f32 %v132, %v102
  %v148 = vmul.f32 %v135, %v102
  %v149 = vmul.f32 %v138, %v102
  %v150 = vmul.f32 %v141, %v102
  %v151 = vmul.f32 %v144, %v102
  %v152 = vadd.f32 %v145, 1e-05
  %v153 = vadd.f32 %v146, 1e-05
  %v154 = vadd.f32 %v147, 1e-05
  %v155 = vadd.f32 %v148, 1e-05
  %v156 = vadd.f32 %v149, 1e-05
  %v157 = vadd.f32 %v150, 1e-05
  %v158 = vadd.f32 %v151, 1e-05
  %v159 = vrsqrt.pop %v152
  %v160 = vrsqrt.pop %v153
  %v161 = vrsqrt.pop %v154
  %v162 = vrsqrt.pop %v155
  %v163 = vrsqrt.pop %v156
  %v164 = vrsqrt.pop %v157
  %v165 = vrsqrt.pop %v158
  %v166 = vmul.f32 %v110, %v159
  %v167 = vmul.f32 %v111, %v160
  %v168 = vmul.f32 %v112, %v161
  %v169 = vmul.f32 %v113, %v162
  %v170 = vmul.f32 %v114, %v163
  %v171 = vmul.f32 %v115, %v164
  %v172 = vmul.f32 %v116, %v165
  %v173 = vlaneseq
  %v174 = vshrl.u32 %v173, 7
  %v175 = vsub.s32 6, %v174
  %v176 = vrot.slane %v15, %v175
  %v177 = vmul.f32 %v166, %v176
  %v178 = vmul.f32 %v167, %v176
  %v179 = vmul.f32 %v168, %v176
  %v180 = vmul.f32 %v169, %v176
  %v181 = vmul.f32 %v170, %v176
  %v182 = vmul.f32 %v171, %v176
  %v183 = vmul.f32 %v172, %v176
  %v184 = vlaneseq
  %v185 = vshrl.u32 %v184, 7
  %v186 = vsub.s32 7, %v185
  %v187 = vrot.slane %v15, %v186
  %v188 = vadd.f32 %v177, %v187
  %v189 = vadd.f32 %v178, %v187
  %v190 = vadd.f32 %v179, %v187
  %v191 = vadd.f32 %v180, %v187
  %v192 = vadd.f32 %v181, %v187
  %v193 = vadd.f32 %v182, %v187
  %v194 = vadd.f32 %v183, %v187
  %v195 = vld [vmem:[%s1 + $0x30] sm:$0xff]
  %v196 = vld [vmem:[%s1 + $0x38] sm:$0xff]
  %v197 = vld [vmem:[%s1 + $0x40] sm:$0xff]
  %v198 = vld [vmem:[%s1 + $0x48] sm:$0xff]
  %v199 = vld [vmem:[%s1 + $0x50] sm:$0xff]
  %v200 = vld [vmem:[%s1 + $0x58] sm:$0xff]
  %v201 = vld [vmem:[%s1 + $0x60] sm:$0xff]
  %v202 = vld [vmem:[%s1 + $0x68] sm:$0xff]
  %v203 = vpack.c.bf16 %v189, %v188
  %v204 = vpack.c.bf16 %v191, %v190
  %v205 = vpack.c.bf16 %v193, %v192
  %v206 = vpack.c.bf16 %v189, %v194
  %v207 = vpack.c.bf16 %v196, %v195
  %v208 = vpack.c.bf16 %v198, %v197
  %v209 = vpack.c.bf16 %v200, %v199
  %v210 = vpack.c.bf16 %v202, %v201
  %v211 = vlaneseq
  %v212 = vshrl.u32 %v211, 7
  %v213 = vsub.s32 1, %v212
  %v214 = vrot.slane %v15, %v213
  %v216 = vsel %vm80, %v203, 0
  %v219 = vsel %vm80, %v204, 0
  %v222 = vsel %vm80, %v205, 0
  %v225 = vsel %vm80, %v206, 0
  %227 = vmatprep.subr.bf16.mxu0 0
  %228 = vmatpush1.bf16.msra.mxu0 %v207
  %229 = vmatprep.subr.bf16.mxu0 0
  %230 = vmatpush1.bf16.msra.mxu0 %v208
  %231 = vmatprep.subr.bf16.mxu0 0
  %232 = vmatpush1.bf16.msra.mxu0 %v209
  %233 = vmatprep.subr.bf16.mxu0 0
  %234 = vmatpush1.bf16.msra.mxu0 %v210
  %235 = vmatprep.subr.bf16.mxu0 0
  %236 = vmatpush1.bf16.msra.mxu0 0
  %237 = vmatprep.subr.bf16.mxu0 0
  %238 = vmatpush1.bf16.msra.mxu0 0
  %239 = vmatprep.subr.bf16.mxu0 0
  %240 = vmatpush1.bf16.msra.mxu0 0
  %241 = vmatprep.subr.bf16.mxu0 0
  %242 = vmatpush1.bf16.msra.mxu0 0
  %243 = vmatprep.subr.bf16.mxu0 0
  %244 = vmatpush1.bf16.msra.mxu0 0
  %245 = vmatprep.subr.bf16.mxu0 0
  %246 = vmatpush1.bf16.msra.mxu0 0
  %247 = vmatprep.subr.bf16.mxu0 0
  %248 = vmatpush1.bf16.msra.mxu0 0
  %249 = vmatprep.subr.bf16.mxu0 0
  %250 = vmatpush1.bf16.msra.mxu0 0
  %251 = vmatprep.subr.bf16.mxu0 0
  %252 = vmatpush1.bf16.msra.mxu0 0
  %253 = vmatprep.subr.bf16.mxu0 0
  %254 = vmatpush1.bf16.msra.mxu0 0
  %255 = vmatprep.subr.bf16.mxu0 0
  %256 = vmatpush1.bf16.msra.mxu0 0
  %257 = vmatprep.subr.bf16.mxu0 0
  %258 = vmatpush1.bf16.msra.mxu0 0
  %259 = vmatprep.mubr.bf16.mxu0 0
  %260 = vmatmul.mubr.bf16.gmra.mrb[0].mxu0 %v216
  %v261 = vpop.f32.mrb[0].mxu0
  %v262 = vadd.f32 %v214, %v261
  %v263 = vpop.f32.mrb[0].mxu0
  %v264 = vpop.f32.mrb[0].mxu0
  %v265 = vadd.f32 %v214, %v264
  %v266 = vpop.f32.mrb[0].mxu0
  %267 = vmatprep.mubr.bf16.mxu0 0
  %268 = vmatmul.mubr.bf16.gmra.mrb[0].mxu0 %v219
  %v269 = vpop.f32.mrb[0].mxu0
  %v270 = vadd.f32 %v214, %v269
  %v271 = vpop.f32.mrb[0].mxu0
  %v272 = vpop.f32.mrb[0].mxu0
  %v273 = vadd.f32 %v214, %v272
  %v274 = vpop.f32.mrb[0].mxu0
  %275 = vmatprep.mubr.bf16.mxu0 0
  %276 = vmatmul.mubr.bf16.gmra.mrb[0].mxu0 %v222
  %v277 = vpop.f32.mrb[0].mxu0
  %v278 = vadd.f32 %v214, %v277
  %v279 = vpop.f32.mrb[0].mxu0
  %v280 = vpop.f32.mrb[0].mxu0
  %v281 = vadd.f32 %v214, %v280
  %v282 = vpop.f32.mrb[0].mxu0
  %283 = vmatprep.mubr.bf16.mxu0 0
  %284 = vmatmul.mubr.bf16.gmra.mrb[0].mxu0 %v225
  %v285 = vpop.f32.mrb[0].mxu0
  %v286 = vadd.f32 %v214, %v285
  %v287 = vpop.f32.mrb[0].mxu0
  %v288 = vpop.f32.mrb[0].mxu0
  %v289 = vadd.f32 %v214, %v288
  %v290 = vpop.f32.mrb[0].mxu0
  %291 = vmatprep.mubr.bf16.mxu0 0
  %292 = vmatmul.mubr.bf16.gmra.mrb[0].mxu0 %v219
  %v293 = vpop.f32.mrb[0].mxu0
  %v294 = vadd.f32 %v214, %v293
  %v295 = vpop.f32.mrb[0].mxu0
  %v296 = vpop.f32.mrb[0].mxu0
  %v297 = vadd.f32 %v214, %v296
  %v298 = vpop.f32.mrb[0].mxu0
  %299 = vmatprep.mubr.bf16.mxu0 0
  %300 = vmatmul.mubr.bf16.gmra.mrb[0].mxu0 %v222
  %v301 = vpop.f32.mrb[0].mxu0
  %v302 = vadd.f32 %v214, %v301
  %v303 = vpop.f32.mrb[0].mxu0
  %v304 = vpop.f32.mrb[0].mxu0
  %v305 = vadd.f32 %v214, %v304
  %v306 = vpop.f32.mrb[0].mxu0
  %307 = vdwg.mxu0
  %v308 = vld [vmem:[%s1 + $0x70] sm:$0xff]
  %v309 = vld [vmem:[%s1 + $0x78] sm:$0xff]
  %v310 = vld [vmem:[%s1 + $0x80] sm:$0xff]
  %v311 = vld [vmem:[%s1 + $0x88] sm:$0xff]
  %v312 = vld [vmem:[%s1 + $0x90] sm:$0xff]
  %v313 = vld [vmem:[%s1 + $0x98] sm:$0xff]
  %v314 = vld [vmem:[%s1 + $0xa0] sm:$0xff]
  %v315 = vld [vmem:[%s1 + $0xa8] sm:$0xff]
  %v316 = vpack.c.bf16 %v309, %v308
  %v317 = vpack.c.bf16 %v311, %v310
  %v318 = vpack.c.bf16 %v313, %v312
  %v319 = vpack.c.bf16 %v315, %v314
  %v320 = vlaneseq
  %v321 = vshrl.u32 %v320, 7
  %v322 = vsub.s32 2, %v321
  %v323 = vrot.slane %v15, %v322
  %324 = vmatprep.subr.bf16.mxu0 0
  %325 = vmatpush1.bf16.msra.mxu0 %v316
  %326 = vmatprep.subr.bf16.mxu0 0
  %327 = vmatpush1.bf16.msra.mxu0 %v317
  %328 = vmatprep.subr.bf16.mxu0 0
  %329 = vmatpush1.bf16.msra.mxu0 %v318
  %330 = vmatprep.subr.bf16.mxu0 0
  %331 = vmatpush1.bf16.msra.mxu0 %v319
  %332 = vmatprep.subr.bf16.mxu0 0
  %333 = vmatpush1.bf16.msra.mxu0 0
  %334 = vmatprep.subr.bf16.mxu0 0
  %335 = vmatpush1.bf16.msra.mxu0 0
  %336 = vmatprep.subr.bf16.mxu0 0
  %337 = vmatpush1.bf16.msra.mxu0 0
  %338 = vmatprep.subr.bf16.mxu0 0
  %339 = vmatpush1.bf16.msra.mxu0 0
  %340 = vmatprep.subr.bf16.mxu0 0
  %341 = vmatpush1.bf16.msra.mxu0 0
  %342 = vmatprep.subr.bf16.mxu0 0
  %343 = vmatpush1.bf16.msra.mxu0 0
  %344 = vmatprep.subr.bf16.mxu0 0
  %345 = vmatpush1.bf16.msra.mxu0 0
  %346 = vmatprep.subr.bf16.mxu0 0
  %347 = vmatpush1.bf16.msra.mxu0 0
  %348 = vmatprep.subr.bf16.mxu0 0
  %349 = vmatpush1.bf16.msra.mxu0 0
  %350 = vmatprep.subr.bf16.mxu0 0
  %351 = vmatpush1.bf16.msra.mxu0 0
  %352 = vmatprep.subr.bf16.mxu0 0
  %353 = vmatpush1.bf16.msra.mxu0 0
  %354 = vmatprep.subr.bf16.mxu0 0
  %355 = vmatpush1.bf16.msra.mxu0 0
  %356 = vmatprep.mubr.bf16.mxu0 0
  %357 = vmatmul.mubr.bf16.gmra.mrb[0].mxu0 %v216
  %v358 = vpop.f32.mrb[0].mxu0
  %v359 = vadd.f32 %v323, %v358
  %v360 = vpop.f32.mrb[0].mxu0
  %v361 = vpop.f32.mrb[0].mxu0
  %v362 = vadd.f32 %v323, %v361
  %v363 = vpop.f32.mrb[0].mxu0
  %364 = vmatprep.mubr.bf16.mxu0 0
  %365 = vmatmul.mubr.bf16.gmra.mrb[0].mxu0 %v219
  %v366 = vpop.f32.mrb[0].mxu0
  %v367 = vadd.f32 %v323, %v366
  %v368 = vpop.f32.mrb[0].mxu0
  %v369 = vpop.f32.mrb[0].mxu0
  %v370 = vadd.f32 %v323, %v369
  %v371 = vpop.f32.mrb[0].mxu0
  %372 = vmatprep.mubr.bf16.mxu0 0
  %373 = vmatmul.mubr.bf16.gmra.mrb[0].mxu0 %v222
  %v374 = vpop.f32.mrb[0].mxu0
  %v375 = vadd.f32 %v323, %v374
  %v376 = vpop.f32.mrb[0].mxu0
  %v377 = vpop.f32.mrb[0].mxu0
  %v378 = vadd.f32 %v323, %v377
  %v379 = vpop.f32.mrb[0].mxu0
  %380 = vmatprep.mubr.bf16.mxu0 0
  %381 = vmatmul.mubr.bf16.gmra.mrb[0].mxu0 %v225
  %v382 = vpop.f32.mrb[0].mxu0
  %v383 = vadd.f32 %v323, %v382
  %v384 = vpop.f32.mrb[0].mxu0
  %v385 = vpop.f32.mrb[0].mxu0
  %v386 = vadd.f32 %v323, %v385
  %v387 = vpop.f32.mrb[0].mxu0
  %388 = vmatprep.mubr.bf16.mxu0 0
  %389 = vmatmul.mubr.bf16.gmra.mrb[0].mxu0 %v219
  %v390 = vpop.f32.mrb[0].mxu0
  %v391 = vadd.f32 %v323, %v390
  %v392 = vpop.f32.mrb[0].mxu0
  %v393 = vpop.f32.mrb[0].mxu0
  %v394 = vadd.f32 %v323, %v393
  %v395 = vpop.f32.mrb[0].mxu0
  %396 = vmatprep.mubr.bf16.mxu0 0
  %397 = vmatmul.mubr.bf16.gmra.mrb[0].mxu0 %v222
  %v398 = vpop.f32.mrb[0].mxu0
  %v399 = vadd.f32 %v323, %v398
  %v400 = vpop.f32.mrb[0].mxu0
  %v401 = vpop.f32.mrb[0].mxu0
  %v402 = vadd.f32 %v323, %v401
  %v403 = vpop.f32.mrb[0].mxu0
  %404 = vdwg.mxu0
  %v405 = vld [vmem:[%s1 + $0xb0] sm:$0xff]
  %v406 = vld [vmem:[%s1 + $0xb8] sm:$0xff]
  %v407 = vld [vmem:[%s1 + $0xc0] sm:$0xff]
  %v408 = vld [vmem:[%s1 + $0xc8] sm:$0xff]
  %v409 = vld [vmem:[%s1 + $0xd0] sm:$0xff]
  %v410 = vld [vmem:[%s1 + $0xd8] sm:$0xff]
  %v411 = vld [vmem:[%s1 + $0xe0] sm:$0xff]
  %v412 = vld [vmem:[%s1 + $0xe8] sm:$0xff]
  %v413 = vpack.c.bf16 %v406, %v405
  %v414 = vpack.c.bf16 %v408, %v407
  %v415 = vpack.c.bf16 %v410, %v409
  %v416 = vpack.c.bf16 %v412, %v411
  %v417 = vlaneseq
  %v418 = vshrl.u32 %v417, 7
  %v419 = vsub.s32 3, %v418
  %v420 = vrot.slane %v15, %v419
  %421 = vmatprep.subr.bf16.mxu0 0
  %422 = vmatpush1.bf16.msra.mxu0 %v413
  %423 = vmatprep.subr.bf16.mxu0 0
  %424 = vmatpush1.bf16.msra.mxu0 %v414
  %425 = vmatprep.subr.bf16.mxu0 0
  %426 = vmatpush1.bf16.msra.mxu0 %v415
  %427 = vmatprep.subr.bf16.mxu0 0
  %428 = vmatpush1.bf16.msra.mxu0 %v416
  %429 = vmatprep.subr.bf16.mxu0 0
  %430 = vmatpush1.bf16.msra.mxu0 0
  %431 = vmatprep.subr.bf16.mxu0 0
  %432 = vmatpush1.bf16.msra.mxu0 0
  %433 = vmatprep.subr.bf16.mxu0 0
  %434 = vmatpush1.bf16.msra.mxu0 0
  %435 = vmatprep.subr.bf16.mxu0 0
  %436 = vmatpush1.bf16.msra.mxu0 0
  %437 = vmatprep.subr.bf16.mxu0 0
  %438 = vmatpush1.bf16.msra.mxu0 0
  %439 = vmatprep.subr.bf16.mxu0 0
  %440 = vmatpush1.bf16.msra.mxu0 0
  %441 = vmatprep.subr.bf16.mxu0 0
  %442 = vmatpush1.bf16.msra.mxu0 0
  %443 = vmatprep.subr.bf16.mxu0 0
  %444 = vmatpush1.bf16.msra.mxu0 0
  %445 = vmatprep.subr.bf16.mxu0 0
  %446 = vmatpush1.bf16.msra.mxu0 0
  %447 = vmatprep.subr.bf16.mxu0 0
  %448 = vmatpush1.bf16.msra.mxu0 0
  %449 = vmatprep.subr.bf16.mxu0 0
  %450 = vmatpush1.bf16.msra.mxu0 0
  %451 = vmatprep.subr.bf16.mxu0 0
  %452 = vmatpush1.bf16.msra.mxu0 0
  %453 = vmatprep.mubr.bf16.mxu0 0
  %454 = vmatmul.mubr.bf16.gmra.mrb[0].mxu0 %v216
  %v455 = vpop.f32.mrb[0].mxu0
  %v456 = vadd.f32 %v420, %v455
  %v457 = vpop.f32.mrb[0].mxu0
  %v458 = vpop.f32.mrb[0].mxu0
  %v459 = vadd.f32 %v420, %v458
  %v460 = vpop.f32.mrb[0].mxu0
  %461 = vmatprep.mubr.bf16.mxu0 0
  %462 = vmatmul.mubr.bf16.gmra.mrb[0].mxu0 %v219
  %v463 = vpop.f32.mrb[0].mxu0
  %v464 = vadd.f32 %v420, %v463
  %v465 = vpop.f32.mrb[0].mxu0
  %v466 = vpop.f32.mrb[0].mxu0
  %v467 = vadd.f32 %v420, %v466
  %v468 = vpop.f32.mrb[0].mxu0
  %469 = vmatprep.mubr.bf16.mxu0 0
  %470 = vmatmul.mubr.bf16.gmra.mrb[0].mxu0 %v222
  %v471 = vpop.f32.mrb[0].mxu0
  %v472 = vadd.f32 %v420, %v471
  %v473 = vpop.f32.mrb[0].mxu0
  %v474 = vpop.f32.mrb[0].mxu0
  %v475 = vadd.f32 %v420, %v474
  %v476 = vpop.f32.mrb[0].mxu0
  %477 = vmatprep.mubr.bf16.mxu0 0
  %478 = vmatmul.mubr.bf16.gmra.mrb[0].mxu0 %v225
  %v479 = vpop.f32.mrb[0].mxu0
  %v480 = vadd.f32 %v420, %v479
  %v481 = vpop.f32.mrb[0].mxu0
  %v482 = vpop.f32.mrb[0].mxu0
  %v483 = vadd.f32 %v420, %v482
  %v484 = vpop.f32.mrb[0].mxu0
  %485 = vmatprep.mubr.bf16.mxu0 0
  %486 = vmatmul.mubr.bf16.gmra.mrb[0].mxu0 %v219
  %v487 = vpop.f32.mrb[0].mxu0
  %v488 = vadd.f32 %v420, %v487
  %v489 = vpop.f32.mrb[0].mxu0
  %v490 = vpop.f32.mrb[0].mxu0
  %v491 = vadd.f32 %v420, %v490
  %v492 = vpop.f32.mrb[0].mxu0
  %493 = vmatprep.mubr.bf16.mxu0 0
  %494 = vmatmul.mubr.bf16.gmra.mrb[0].mxu0 %v222
  %v495 = vpop.f32.mrb[0].mxu0
  %v496 = vadd.f32 %v420, %v495
  %v497 = vpop.f32.mrb[0].mxu0
  %v498 = vpop.f32.mrb[0].mxu0
  %v499 = vadd.f32 %v420, %v498
  %v500 = vpop.f32.mrb[0].mxu0
  %501 = vdwg.mxu0
  %v502 = vpack.c.bf16 %v265, %v262
  %v503 = vpack.c.bf16 %v273, %v270
  %v504 = vpack.c.bf16 %v281, %v278
  %v505 = vpack.c.bf16 %v289, %v286
  %v506 = vpack.c.bf16 %v297, %v294
  %v507 = vpack.c.bf16 %v305, %v302
  %v508 = vpack.c.bf16 %v362, %v359
  %v509 = vpack.c.bf16 %v370, %v367
  %v510 = vpack.c.bf16 %v378, %v375
  %v511 = vpack.c.bf16 %v386, %v383
  %v512 = vpack.c.bf16 %v394, %v391
  %v513 = vpack.c.bf16 %v402, %v399
  %v515 = vsel %vm80, %v502, 0
  %v518 = vsel %vm80, %v503, 0
  %v521 = vsel %vm80, %v504, 0
  %v524 = vsel %vm80, %v505, 0
  %v527 = vsel %vm80, %v506, 0
  %v530 = vsel %vm80, %v507, 0
  %v533 = vsel %vm80, %v508, 0
  %v536 = vsel %vm80, %v509, 0
  %v539 = vsel %vm80, %v510, 0
  %v542 = vsel %vm80, %v511, 0
  %v545 = vsel %vm80, %v512, 0
  %v548 = vsel %vm80, %v513, 0
  %550 = vmatprep.subr.bf16.mxu0 0
  %551 = vmatpush1.bf16.xpose.msra.mxu0 %v533
  %552 = vmatprep.subr.bf16.mxu0 0
  %553 = vmatpush1.bf16.xpose.msra.mxu0 %v536
  %554 = vmatprep.subr.bf16.mxu0 0
  %555 = vmatpush1.bf16.xpose.msra.mxu0 %v539
  %556 = vmatprep.subr.bf16.mxu0 0
  %557 = vmatpush1.bf16.xpose.msra.mxu0 %v542
  %558 = vmatprep.subr.bf16.mxu0 0
  %559 = vmatpush1.bf16.xpose.msra.mxu0 %v545
  %560 = vmatprep.subr.bf16.mxu0 0
  %561 = vmatpush1.bf16.xpose.msra.mxu0 %v548
  %562 = vmatprep.subr.bf16.mxu0 0
  %563 = vmatpush1.bf16.xpose.msra.mxu0 0
  %564 = vmatprep.subr.bf16.mxu0 0
  %565 = vmatpush1.bf16.xpose.msra.mxu0 0
  %566 = vmatprep.subr.bf16.mxu0 0
  %567 = vmatpush1.bf16.xpose.msra.mxu0 0
  %568 = vmatprep.subr.bf16.mxu0 0
  %569 = vmatpush1.bf16.xpose.msra.mxu0 0
  %570 = vmatprep.subr.bf16.mxu0 0
  %571 = vmatpush1.bf16.xpose.msra.mxu0 0
  %572 = vmatprep.subr.bf16.mxu0 0
  %573 = vmatpush1.bf16.xpose.msra.mxu0 0
  %574 = vmatprep.subr.bf16.mxu0 0
  %575 = vmatpush1.bf16.xpose.msra.mxu0 0
  %576 = vmatprep.subr.bf16.mxu0 0
  %577 = vmatpush1.bf16.xpose.msra.mxu0 0
  %578 = vmatprep.subr.bf16.mxu0 0
  %579 = vmatpush1.bf16.xpose.msra.mxu0 0
  %580 = vmatprep.subr.bf16.mxu0 0
  %581 = vmatpush1.bf16.xpose.msra.mxu0 0
  %582 = vmatprep.mubr.bf16.mxu0 0
  %583 = vmatmul.mubr.bf16.gmra.mrb[0].mxu0 %v515
  %v584 = vpop.f32.mrb[0].mxu0
  %v585 = vadd.f32 0.0, %v584
  %v586 = vpop.f32.mrb[0].mxu0
  %v587 = vpop.f32.mrb[0].mxu0
  %v588 = vadd.f32 0.0, %v587
  %v589 = vpop.f32.mrb[0].mxu0
  %590 = vmatprep.mubr.bf16.mxu0 0
  %591 = vmatmul.mubr.bf16.gmra.mrb[0].mxu0 %v518
  %v592 = vpop.f32.mrb[0].mxu0
  %v593 = vadd.f32 0.0, %v592
  %v594 = vpop.f32.mrb[0].mxu0
  %v595 = vpop.f32.mrb[0].mxu0
  %v596 = vadd.f32 0.0, %v595
  %v597 = vpop.f32.mrb[0].mxu0
  %598 = vmatprep.mubr.bf16.mxu0 0
  %599 = vmatmul.mubr.bf16.gmra.mrb[0].mxu0 %v521
  %v600 = vpop.f32.mrb[0].mxu0
  %v601 = vadd.f32 0.0, %v600
  %v602 = vpop.f32.mrb[0].mxu0
  %v603 = vpop.f32.mrb[0].mxu0
  %v604 = vadd.f32 0.0, %v603
  %v605 = vpop.f32.mrb[0].mxu0
  %606 = vmatprep.mubr.bf16.mxu0 0
  %607 = vmatmul.mubr.bf16.gmra.mrb[0].mxu0 %v524
  %v608 = vpop.f32.mrb[0].mxu0
  %v609 = vadd.f32 0.0, %v608
  %v610 = vpop.f32.mrb[0].mxu0
  %v611 = vpop.f32.mrb[0].mxu0
  %v612 = vadd.f32 0.0, %v611
  %v613 = vpop.f32.mrb[0].mxu0
  %614 = vmatprep.mubr.bf16.mxu0 0
  %615 = vmatmul.mubr.bf16.gmra.mrb[0].mxu0 %v527
  %v616 = vpop.f32.mrb[0].mxu0
  %v617 = vadd.f32 0.0, %v616
  %v618 = vpop.f32.mrb[0].mxu0
  %v619 = vpop.f32.mrb[0].mxu0
  %v620 = vadd.f32 0.0, %v619
  %v621 = vpop.f32.mrb[0].mxu0
  %622 = vmatprep.mubr.bf16.mxu0 0
  %623 = vmatmul.mubr.bf16.gmra.mrb[0].mxu0 %v530
  %v624 = vpop.f32.mrb[0].mxu0
  %v625 = vadd.f32 0.0, %v624
  %v626 = vpop.f32.mrb[0].mxu0
  %v627 = vpop.f32.mrb[0].mxu0
  %v628 = vadd.f32 0.0, %v627
  %v629 = vpop.f32.mrb[0].mxu0
  %630 = vdwg.mxu0
  %v631 = vmul.f32 %v585, 0.125
  %v632 = vmul.f32 %v588, 0.125
  %v633 = vmul.f32 %v593, 0.125
  %v634 = vmul.f32 %v596, 0.125
  %v635 = vmul.f32 %v601, 0.125
  %v636 = vmul.f32 %v604, 0.125
  %v637 = vmul.f32 %v609, 0.125
  %v638 = vmul.f32 %v612, 0.125
  %v639 = vmul.f32 %v617, 0.125
  %v640 = vmul.f32 %v620, 0.125
  %v641 = vmul.f32 %v625, 0.125
  %v642 = vmul.f32 %v628, 0.125
  %v643 = vlaneseq
  %v644 = vshrl.u32 %v643, 7
  %v645 = vadd.s32 %v644, 8
  %v646 = vadd.s32 %v644, 16
  %v647 = vadd.s32 %v644, 24
  %v648 = vadd.s32 %v644, 32
  %v649 = vadd.s32 %v644, 40
  %v650 = vadd.s32 %v644, 48
  %v651 = vadd.s32 %v644, 56
  %v652 = vadd.s32 %v644, 64
  %v653 = vadd.s32 %v644, 72
  %v654 = vadd.s32 %v644, 80
  %v655 = vadd.s32 %v644, 88
  %v656 = vlaneseq
  %v657 = vand.u32 %v656, 127
  %vm658 = vcmp.ge.s32.totalorder %v644, 0
  %vm659 = vcmp.ge.s32.totalorder %v645, 0
  %vm660 = vcmp.ge.s32.totalorder %v646, 0
  %vm661 = vcmp.ge.s32.totalorder %v647, 0
  %vm662 = vcmp.ge.s32.totalorder %v648, 0
  %vm663 = vcmp.ge.s32.totalorder %v649, 0
  %vm664 = vcmp.ge.s32.totalorder %v650, 0
  %vm665 = vcmp.ge.s32.totalorder %v651, 0
  %vm666 = vcmp.ge.s32.totalorder %v652, 0
  %vm667 = vcmp.ge.s32.totalorder %v653, 0
  %vm668 = vcmp.ge.s32.totalorder %v654, 0
  %vm669 = vcmp.ge.s32.totalorder %v655, 0
  %vm670 = vcmp.lt.s32.totalorder %v644, 48
  %vm671 = vcmp.lt.s32.totalorder %v645, 48
  %vm672 = vcmp.lt.s32.totalorder %v646, 48
  %vm673 = vcmp.lt.s32.totalorder %v647, 48
  %vm674 = vcmp.lt.s32.totalorder %v648, 48
  %vm675 = vcmp.lt.s32.totalorder %v649, 48
  %vm676 = vcmp.lt.s32.totalorder %v650, 48
  %vm677 = vcmp.lt.s32.totalorder %v651, 48
  %vm678 = vcmp.lt.s32.totalorder %v652, 48
  %vm679 = vcmp.lt.s32.totalorder %v653, 48
  %vm680 = vcmp.lt.s32.totalorder %v654, 48
  %vm681 = vcmp.lt.s32.totalorder %v655, 48
  %vm682 = vmand %vm658, %vm670
  %vm683 = vmand %vm659, %vm671
  %vm684 = vmand %vm660, %vm672
  %vm685 = vmand %vm661, %vm673
  %vm686 = vmand %vm662, %vm674
  %vm687 = vmand %vm663, %vm675
  %vm688 = vmand %vm664, %vm676
  %vm689 = vmand %vm665, %vm677
  %vm690 = vmand %vm666, %vm678
  %vm691 = vmand %vm667, %vm679
  %vm692 = vmand %vm668, %vm680
  %vm693 = vmand %vm669, %vm681
  %vm694 = vcmp.ge.s32.totalorder %v657, 0
  %vm695 = vcmp.lt.s32.totalorder %v657, 44
  %vm696 = vmand %vm694, %vm695
  %vm697 = vmand %vm682, %vm696
  %vm698 = vmand %vm683, %vm696
  %vm699 = vmand %vm684, %vm696
  %vm700 = vmand %vm685, %vm696
  %vm701 = vmand %vm686, %vm696
  %vm702 = vmand %vm687, %vm696
  %vm703 = vmand %vm688, %vm696
  %vm704 = vmand %vm689, %vm696
  %vm705 = vmand %vm690, %vm696
  %vm706 = vmand %vm691, %vm696
  %vm707 = vmand %vm692, %vm696
  %vm708 = vmand %vm693, %vm696
  %vm709 = vcmp.ge.s32.totalorder %v644, 48
  %vm710 = vcmp.ge.s32.totalorder %v645, 48
  %vm711 = vcmp.ge.s32.totalorder %v646, 48
  %vm712 = vcmp.ge.s32.totalorder %v647, 48
  %vm713 = vcmp.ge.s32.totalorder %v648, 48
  %vm714 = vcmp.ge.s32.totalorder %v649, 48
  %vm715 = vcmp.ge.s32.totalorder %v650, 48
  %vm716 = vcmp.ge.s32.totalorder %v651, 48
  %vm717 = vcmp.ge.s32.totalorder %v652, 48
  %vm718 = vcmp.ge.s32.totalorder %v653, 48
  %vm719 = vcmp.ge.s32.totalorder %v654, 48
  %vm720 = vcmp.ge.s32.totalorder %v655, 48
  %vm721 = vcmp.lt.s32.totalorder %v644, 96
  %vm722 = vcmp.lt.s32.totalorder %v645, 96
  %vm723 = vcmp.lt.s32.totalorder %v646, 96
  %vm724 = vcmp.lt.s32.totalorder %v647, 96
  %vm725 = vcmp.lt.s32.totalorder %v648, 96
  %vm726 = vcmp.lt.s32.totalorder %v649, 96
  %vm727 = vcmp.lt.s32.totalorder %v650, 96
  %vm728 = vcmp.lt.s32.totalorder %v651, 96
  %vm729 = vcmp.lt.s32.totalorder %v652, 96
  %vm730 = vcmp.lt.s32.totalorder %v653, 96
  %vm731 = vcmp.lt.s32.totalorder %v654, 96
  %vm732 = vcmp.lt.s32.totalorder %v655, 96
  %vm733 = vmand %vm709, %vm721
  %vm734 = vmand %vm710, %vm722
  %vm735 = vmand %vm711, %vm723
  %vm736 = vmand %vm712, %vm724
  %vm737 = vmand %vm713, %vm725
  %vm738 = vmand %vm714, %vm726
  %vm739 = vmand %vm715, %vm727
  %vm740 = vmand %vm716, %vm728
  %vm741 = vmand %vm717, %vm729
  %vm742 = vmand %vm718, %vm730
  %vm743 = vmand %vm719, %vm731
  %vm744 = vmand %vm720, %vm732
  %vm745 = vcmp.ge.s32.totalorder %v657, 48
  %vm746 = vcmp.lt.s32.totalorder %v657, 92
  %vm747 = vmand %vm745, %vm746
  %vm748 = vmand %vm733, %vm747
  %vm749 = vmand %vm734, %vm747
  %vm750 = vmand %vm735, %vm747
  %vm751 = vmand %vm736, %vm747
  %vm752 = vmand %vm737, %vm747
  %vm753 = vmand %vm738, %vm747
  %vm754 = vmand %vm739, %vm747
  %vm755 = vmand %vm740, %vm747
  %vm756 = vmand %vm741, %vm747
  %vm757 = vmand %vm742, %vm747
  %vm758 = vmand %vm743, %vm747
  %vm759 = vmand %vm744, %vm747
  %vm760 = vmor %vm697, %vm748
  %vm761 = vmor %vm698, %vm749
  %vm762 = vmor %vm699, %vm750
  %vm763 = vmor %vm700, %vm751
  %vm764 = vmor %vm701, %vm752
  %vm765 = vmor %vm702, %vm753
  %vm766 = vmor %vm703, %vm754
  %vm767 = vmor %vm704, %vm755
  %vm768 = vmor %vm705, %vm756
  %vm769 = vmor %vm706, %vm757
  %vm770 = vmor %vm707, %vm758
  %vm771 = vmor %vm708, %vm759
  %v772 = vsel %vm760, %v631, -1e+30
  %v773 = vsel %vm761, %v632, -1e+30
  %v774 = vsel %vm762, %v633, -1e+30
  %v775 = vsel %vm763, %v634, -1e+30
  %v776 = vsel %vm764, %v635, -1e+30
  %v777 = vsel %vm765, %v636, -1e+30
  %v778 = vsel %vm766, %v637, -1e+30
  %v779 = vsel %vm767, %v638, -1e+30
  %v780 = vsel %vm768, %v639, -1e+30
  %v781 = vsel %vm769, %v640, -1e+30
  %v782 = vsel %vm770, %v641, -1e+30
  %v783 = vsel %vm771, %v642, -1e+30
  %vm784 = vcmask 785408
  %v785 = vsel %vm784, %v772, -inf
  %786 = vmax.xlane.f32.xlu0 %v785
  %v787 = vpop.xlane.xlu0 %786
  %v788 = vsel %vm784, %v773, -inf
  %789 = vmax.xlane.f32.xlu0 %v788
  %v790 = vpop.xlane.xlu0 %789
  %v791 = vsel %vm784, %v774, -inf
  %792 = vmax.xlane.f32.xlu0 %v791
  %v793 = vpop.xlane.xlu0 %792
  %v794 = vsel %vm784, %v775, -inf
  %795 = vmax.xlane.f32.xlu0 %v794
  %v796 = vpop.xlane.xlu0 %795
  %v797 = vsel %vm784, %v776, -inf
  %798 = vmax.xlane.f32.xlu0 %v797
  %v799 = vpop.xlane.xlu0 %798
  %v800 = vsel %vm784, %v777, -inf
  %801 = vmax.xlane.f32.xlu0 %v800
  %v802 = vpop.xlane.xlu0 %801
  %v803 = vsel %vm784, %v778, -inf
  %804 = vmax.xlane.f32.xlu0 %v803
  %v805 = vpop.xlane.xlu0 %804
  %v806 = vsel %vm784, %v779, -inf
  %807 = vmax.xlane.f32.xlu0 %v806
  %v808 = vpop.xlane.xlu0 %807
  %v809 = vsel %vm784, %v780, -inf
  %810 = vmax.xlane.f32.xlu0 %v809
  %v811 = vpop.xlane.xlu0 %810
  %v812 = vsel %vm784, %v781, -inf
  %813 = vmax.xlane.f32.xlu0 %v812
  %v814 = vpop.xlane.xlu0 %813
  %v815 = vsel %vm784, %v782, -inf
  %816 = vmax.xlane.f32.xlu0 %v815
  %v817 = vpop.xlane.xlu0 %816
  %v818 = vsel %vm784, %v783, -inf
  %819 = vmax.xlane.f32.xlu0 %v818
  %v820 = vpop.xlane.xlu0 %819
  %v821 = vsub.f32 %v772, %v787
  %v822 = vsub.f32 %v773, %v790
  %v823 = vsub.f32 %v774, %v793
  %v824 = vsub.f32 %v775, %v796
  %v825 = vsub.f32 %v776, %v799
  %v826 = vsub.f32 %v777, %v802
  %v827 = vsub.f32 %v778, %v805
  %v828 = vsub.f32 %v779, %v808
  %v829 = vsub.f32 %v780, %v811
  %v830 = vsub.f32 %v781, %v814
  %v831 = vsub.f32 %v782, %v817
  %v832 = vsub.f32 %v783, %v820
  %v833 = vmul.f32 %v821, 1.442695
  %v834 = vpow.pop %v833
  %v835 = vmul.f32 %v822, 1.442695
  %v836 = vpow.pop %v835
  %v837 = vmul.f32 %v823, 1.442695
  %v838 = vpow.pop %v837
  %v839 = vmul.f32 %v824, 1.442695
  %v840 = vpow.pop %v839
  %v841 = vmul.f32 %v825, 1.442695
  %v842 = vpow.pop %v841
  %v843 = vmul.f32 %v826, 1.442695
  %v844 = vpow.pop %v843
  %v845 = vmul.f32 %v827, 1.442695
  %v846 = vpow.pop %v845
  %v847 = vmul.f32 %v828, 1.442695
  %v848 = vpow.pop %v847
  %v849 = vmul.f32 %v829, 1.442695
  %v850 = vpow.pop %v849
  %v851 = vmul.f32 %v830, 1.442695
  %v852 = vpow.pop %v851
  %v853 = vmul.f32 %v831, 1.442695
  %v854 = vpow.pop %v853
  %v855 = vmul.f32 %v832, 1.442695
  %v856 = vpow.pop %v855
  %v857 = vsel %vm784, %v834, 0.0
  %858 = vadd.xlane.f32.xlu0 %v857
  %v859 = vpop.xlane.xlu0 %858
  %v860 = vsel %vm784, %v836, 0.0
  %861 = vadd.xlane.f32.xlu0 %v860
  %v862 = vpop.xlane.xlu0 %861
  %v863 = vsel %vm784, %v838, 0.0
  %864 = vadd.xlane.f32.xlu0 %v863
  %v865 = vpop.xlane.xlu0 %864
  %v866 = vsel %vm784, %v840, 0.0
  %867 = vadd.xlane.f32.xlu0 %v866
  %v868 = vpop.xlane.xlu0 %867
  %v869 = vsel %vm784, %v842, 0.0
  %870 = vadd.xlane.f32.xlu0 %v869
  %v871 = vpop.xlane.xlu0 %870
  %v872 = vsel %vm784, %v844, 0.0
  %873 = vadd.xlane.f32.xlu0 %v872
  %v874 = vpop.xlane.xlu0 %873
  %v875 = vsel %vm784, %v846, 0.0
  %876 = vadd.xlane.f32.xlu0 %v875
  %v877 = vpop.xlane.xlu0 %876
  %v878 = vsel %vm784, %v848, 0.0
  %879 = vadd.xlane.f32.xlu0 %v878
  %v880 = vpop.xlane.xlu0 %879
  %v881 = vsel %vm784, %v850, 0.0
  %882 = vadd.xlane.f32.xlu0 %v881
  %v883 = vpop.xlane.xlu0 %882
  %v884 = vsel %vm784, %v852, 0.0
  %885 = vadd.xlane.f32.xlu0 %v884
  %v886 = vpop.xlane.xlu0 %885
  %v887 = vsel %vm784, %v854, 0.0
  %888 = vadd.xlane.f32.xlu0 %v887
  %v889 = vpop.xlane.xlu0 %888
  %v890 = vsel %vm784, %v856, 0.0
  %891 = vadd.xlane.f32.xlu0 %v890
  %v892 = vpop.xlane.xlu0 %891
  %v893 = vrcp.pop %v859
  %v894 = vmul.f32 %v834, %v893
  %v895 = vrcp.pop %v862
  %v896 = vmul.f32 %v836, %v895
  %v897 = vrcp.pop %v865
  %v898 = vmul.f32 %v838, %v897
  %v899 = vrcp.pop %v868
  %v900 = vmul.f32 %v840, %v899
  %v901 = vrcp.pop %v871
  %v902 = vmul.f32 %v842, %v901
  %v903 = vrcp.pop %v874
  %v904 = vmul.f32 %v844, %v903
  %v905 = vrcp.pop %v877
  %v906 = vmul.f32 %v846, %v905
  %v907 = vrcp.pop %v880
  %v908 = vmul.f32 %v848, %v907
  %v909 = vrcp.pop %v883
  %v910 = vmul.f32 %v850, %v909
  %v911 = vrcp.pop %v886
  %v912 = vmul.f32 %v852, %v911
  %v913 = vrcp.pop %v889
  %v914 = vmul.f32 %v854, %v913
  %v915 = vrcp.pop %v892
  %v916 = vmul.f32 %v856, %v915
  %v917 = vpack.c.bf16 %v896, %v894
  %v918 = vpack.c.bf16 %v900, %v898
  %v919 = vpack.c.bf16 %v904, %v902
  %v920 = vpack.c.bf16 %v908, %v906
  %v921 = vpack.c.bf16 %v912, %v910
  %v922 = vpack.c.bf16 %v916, %v914
  %v923 = vpack.c.bf16 %v459, %v456
  %v924 = vpack.c.bf16 %v467, %v464
  %v925 = vpack.c.bf16 %v475, %v472
  %v926 = vpack.c.bf16 %v483, %v480
  %v927 = vpack.c.bf16 %v491, %v488
  %v928 = vpack.c.bf16 %v499, %v496
  %v930 = vsel %vm784, %v917, 0
  %v933 = vsel %vm784, %v918, 0
  %v936 = vsel %vm784, %v919, 0
  %v939 = vsel %vm784, %v920, 0
  %v942 = vsel %vm784, %v921, 0
  %v945 = vsel %vm784, %v922, 0
  %947 = vmatprep.subr.bf16.mxu0 0
  %948 = vmatpush1.bf16.msra.mxu0 %v923
  %949 = vmatprep.subr.bf16.mxu0 0
  %950 = vmatpush1.bf16.msra.mxu0 %v924
  %951 = vmatprep.subr.bf16.mxu0 0
  %952 = vmatpush1.bf16.msra.mxu0 %v925
  %953 = vmatprep.subr.bf16.mxu0 0
  %954 = vmatpush1.bf16.msra.mxu0 %v926
  %955 = vmatprep.subr.bf16.mxu0 0
  %956 = vmatpush1.bf16.msra.mxu0 %v927
  %957 = vmatprep.subr.bf16.mxu0 0
  %958 = vmatpush1.bf16.msra.mxu0 %v928
  %959 = vmatprep.subr.bf16.mxu0 0
  %960 = vmatpush1.bf16.msra.mxu0 0
  %961 = vmatprep.subr.bf16.mxu0 0
  %962 = vmatpush1.bf16.msra.mxu0 0
  %963 = vmatprep.subr.bf16.mxu0 0
  %964 = vmatpush1.bf16.msra.mxu0 0
  %965 = vmatprep.subr.bf16.mxu0 0
  %966 = vmatpush1.bf16.msra.mxu0 0
  %967 = vmatprep.subr.bf16.mxu0 0
  %968 = vmatpush1.bf16.msra.mxu0 0
  %969 = vmatprep.subr.bf16.mxu0 0
  %970 = vmatpush1.bf16.msra.mxu0 0
  %971 = vmatprep.subr.bf16.mxu0 0
  %972 = vmatpush1.bf16.msra.mxu0 0
  %973 = vmatprep.subr.bf16.mxu0 0
  %974 = vmatpush1.bf16.msra.mxu0 0
  %975 = vmatprep.subr.bf16.mxu0 0
  %976 = vmatpush1.bf16.msra.mxu0 0
  %977 = vmatprep.subr.bf16.mxu0 0
  %978 = vmatpush1.bf16.msra.mxu0 0
  %979 = vmatprep.mubr.bf16.mxu0 0
  %980 = vmatmul.mubr.bf16.gmra.mrb[0].mxu0 %v930
  %v981 = vpop.f32.mrb[0].mxu0
  %v982 = vadd.f32 0.0, %v981
  %v983 = vpop.f32.mrb[0].mxu0
  %v984 = vpop.f32.mrb[0].mxu0
  %v985 = vadd.f32 0.0, %v984
  %v986 = vpop.f32.mrb[0].mxu0
  %987 = vmatprep.mubr.bf16.mxu0 0
  %988 = vmatmul.mubr.bf16.gmra.mrb[0].mxu0 %v933
  %v989 = vpop.f32.mrb[0].mxu0
  %v990 = vadd.f32 0.0, %v989
  %v991 = vpop.f32.mrb[0].mxu0
  %v992 = vpop.f32.mrb[0].mxu0
  %v993 = vadd.f32 0.0, %v992
  %v994 = vpop.f32.mrb[0].mxu0
  %995 = vmatprep.mubr.bf16.mxu0 0
  %996 = vmatmul.mubr.bf16.gmra.mrb[0].mxu0 %v936
  %v997 = vpop.f32.mrb[0].mxu0
  %v998 = vadd.f32 0.0, %v997
  %v999 = vpop.f32.mrb[0].mxu0
  %v1000 = vpop.f32.mrb[0].mxu0
  %v1001 = vadd.f32 0.0, %v1000
  %v1002 = vpop.f32.mrb[0].mxu0
  %1003 = vmatprep.mubr.bf16.mxu0 0
  %1004 = vmatmul.mubr.bf16.gmra.mrb[0].mxu0 %v939
  %v1005 = vpop.f32.mrb[0].mxu0
  %v1006 = vadd.f32 0.0, %v1005
  %v1007 = vpop.f32.mrb[0].mxu0
  %v1008 = vpop.f32.mrb[0].mxu0
  %v1009 = vadd.f32 0.0, %v1008
  %v1010 = vpop.f32.mrb[0].mxu0
  %1011 = vmatprep.mubr.bf16.mxu0 0
  %1012 = vmatmul.mubr.bf16.gmra.mrb[0].mxu0 %v942
  %v1013 = vpop.f32.mrb[0].mxu0
  %v1014 = vadd.f32 0.0, %v1013
  %v1015 = vpop.f32.mrb[0].mxu0
  %v1016 = vpop.f32.mrb[0].mxu0
  %v1017 = vadd.f32 0.0, %v1016
  %v1018 = vpop.f32.mrb[0].mxu0
  %1019 = vmatprep.mubr.bf16.mxu0 0
  %1020 = vmatmul.mubr.bf16.gmra.mrb[0].mxu0 %v945
  %v1021 = vpop.f32.mrb[0].mxu0
  %v1022 = vadd.f32 0.0, %v1021
  %v1023 = vpop.f32.mrb[0].mxu0
  %v1024 = vpop.f32.mrb[0].mxu0
  %v1025 = vadd.f32 0.0, %v1024
  %v1026 = vpop.f32.mrb[0].mxu0
  %1027 = vdwg.mxu0
  %v1028 = vld [vmem:[%s1 + $0xf0] sm:$0xff]
  %v1029 = vld [vmem:[%s1 + $0xf8] sm:$0xff]
  %v1030 = vld [vmem:[%s1 + $0x100] sm:$0xff]
  %v1031 = vld [vmem:[%s1 + $0x108] sm:$0xff]
  %v1032 = vld [vmem:[%s1 + $0x110] sm:$0xff]
  %v1033 = vld [vmem:[%s1 + $0x118] sm:$0xff]
  %v1034 = vld [vmem:[%s1 + $0x120] sm:$0xff]
  %v1035 = vld [vmem:[%s1 + $0x128] sm:$0xff]
  %v1036 = vpack.c.bf16 %v985, %v982
  %v1037 = vpack.c.bf16 %v993, %v990
  %v1038 = vpack.c.bf16 %v1001, %v998
  %v1039 = vpack.c.bf16 %v1009, %v1006
  %v1040 = vpack.c.bf16 %v1017, %v1014
  %v1041 = vpack.c.bf16 %v1025, %v1022
  %v1042 = vpack.c.bf16 %v1029, %v1028
  %v1043 = vpack.c.bf16 %v1031, %v1030
  %v1044 = vpack.c.bf16 %v1033, %v1032
  %v1045 = vpack.c.bf16 %v1035, %v1034
  %v1047 = vsel %vm80, %v1036, 0
  %v1050 = vsel %vm80, %v1037, 0
  %v1053 = vsel %vm80, %v1038, 0
  %v1056 = vsel %vm80, %v1039, 0
  %v1059 = vsel %vm80, %v1040, 0
  %v1062 = vsel %vm80, %v1041, 0
  %1064 = vmatprep.subr.bf16.mxu0 0
  %1065 = vmatpush1.bf16.msra.mxu0 %v1042
  %1066 = vmatprep.subr.bf16.mxu0 0
  %1067 = vmatpush1.bf16.msra.mxu0 %v1043
  %1068 = vmatprep.subr.bf16.mxu0 0
  %1069 = vmatpush1.bf16.msra.mxu0 %v1044
  %1070 = vmatprep.subr.bf16.mxu0 0
  %1071 = vmatpush1.bf16.msra.mxu0 %v1045
  %1072 = vmatprep.subr.bf16.mxu0 0
  %1073 = vmatpush1.bf16.msra.mxu0 0
  %1074 = vmatprep.subr.bf16.mxu0 0
  %1075 = vmatpush1.bf16.msra.mxu0 0
  %1076 = vmatprep.subr.bf16.mxu0 0
  %1077 = vmatpush1.bf16.msra.mxu0 0
  %1078 = vmatprep.subr.bf16.mxu0 0
  %1079 = vmatpush1.bf16.msra.mxu0 0
  %1080 = vmatprep.subr.bf16.mxu0 0
  %1081 = vmatpush1.bf16.msra.mxu0 0
  %1082 = vmatprep.subr.bf16.mxu0 0
  %1083 = vmatpush1.bf16.msra.mxu0 0
  %1084 = vmatprep.subr.bf16.mxu0 0
  %1085 = vmatpush1.bf16.msra.mxu0 0
  %1086 = vmatprep.subr.bf16.mxu0 0
  %1087 = vmatpush1.bf16.msra.mxu0 0
  %1088 = vmatprep.subr.bf16.mxu0 0
  %1089 = vmatpush1.bf16.msra.mxu0 0
  %1090 = vmatprep.subr.bf16.mxu0 0
  %1091 = vmatpush1.bf16.msra.mxu0 0
  %1092 = vmatprep.subr.bf16.mxu0 0
  %1093 = vmatpush1.bf16.msra.mxu0 0
  %1094 = vmatprep.subr.bf16.mxu0 0
  %1095 = vmatpush1.bf16.msra.mxu0 0
  %1096 = vmatprep.mubr.bf16.mxu0 0
  %1097 = vmatmul.mubr.bf16.gmra.mrb[0].mxu0 %v1047
  %v1098 = vpop.f32.mrb[0].mxu0
  %v1099 = vadd.f32 0.0, %v1098
  %v1100 = vpop.f32.mrb[0].mxu0
  %v1101 = vpop.f32.mrb[0].mxu0
  %v1102 = vadd.f32 0.0, %v1101
  %v1103 = vpop.f32.mrb[0].mxu0
  %1104 = vmatprep.mubr.bf16.mxu0 0
  %1105 = vmatmul.mubr.bf16.gmra.mrb[0].mxu0 %v1050
  %v1106 = vpop.f32.mrb[0].mxu0
  %v1107 = vadd.f32 0.0, %v1106
  %v1108 = vpop.f32.mrb[0].mxu0
  %v1109 = vpop.f32.mrb[0].mxu0
  %v1110 = vadd.f32 0.0, %v1109
  %v1111 = vpop.f32.mrb[0].mxu0
  %1112 = vmatprep.mubr.bf16.mxu0 0
  %1113 = vmatmul.mubr.bf16.gmra.mrb[0].mxu0 %v1053
  %v1114 = vpop.f32.mrb[0].mxu0
  %v1115 = vadd.f32 0.0, %v1114
  %v1116 = vpop.f32.mrb[0].mxu0
  %v1117 = vpop.f32.mrb[0].mxu0
  %v1118 = vadd.f32 0.0, %v1117
  %v1119 = vpop.f32.mrb[0].mxu0
  %1120 = vmatprep.mubr.bf16.mxu0 0
  %1121 = vmatmul.mubr.bf16.gmra.mrb[0].mxu0 %v1056
  %v1122 = vpop.f32.mrb[0].mxu0
  %v1123 = vadd.f32 0.0, %v1122
  %v1124 = vpop.f32.mrb[0].mxu0
  %v1125 = vpop.f32.mrb[0].mxu0
  %v1126 = vadd.f32 0.0, %v1125
  %v1127 = vpop.f32.mrb[0].mxu0
  %1128 = vmatprep.mubr.bf16.mxu0 0
  %1129 = vmatmul.mubr.bf16.gmra.mrb[0].mxu0 %v1059
  %v1130 = vpop.f32.mrb[0].mxu0
  %v1131 = vadd.f32 0.0, %v1130
  %v1132 = vpop.f32.mrb[0].mxu0
  %v1133 = vpop.f32.mrb[0].mxu0
  %v1134 = vadd.f32 0.0, %v1133
  %v1135 = vpop.f32.mrb[0].mxu0
  %1136 = vmatprep.mubr.bf16.mxu0 0
  %1137 = vmatmul.mubr.bf16.gmra.mrb[0].mxu0 %v1062
  %v1138 = vpop.f32.mrb[0].mxu0
  %v1139 = vadd.f32 0.0, %v1138
  %v1140 = vpop.f32.mrb[0].mxu0
  %v1141 = vpop.f32.mrb[0].mxu0
  %v1142 = vadd.f32 0.0, %v1141
  %v1143 = vpop.f32.mrb[0].mxu0
  %1144 = vdwg.mxu0
  %v1145 = vadd.f32 %v69, %v1099
  %v1146 = vadd.f32 %v75, %v1102
  %v1147 = vadd.f32 %v76, %v1107
  %v1148 = vadd.f32 %v77, %v1110
  %v1149 = vadd.f32 %v78, %v1115
  %v1150 = vadd.f32 %v79, %v1118
  %v1151 = vadd.f32 %v72, %v1123
  %v1152 = vadd.f32 %v75, %v1126
  %v1153 = vadd.f32 %v76, %v1131
  %v1154 = vadd.f32 %v77, %v1134
  %v1155 = vadd.f32 %v78, %v1139
  %v1156 = vadd.f32 %v79, %v1142
  %v1157 = vlaneseq
  %v1158 = vshrl.u32 %v1157, 7
  %v1159 = vsub.s32 4, %v1158
  %v1160 = vrot.slane %v15, %v1159
  %v1161 = vadd.f32 %v1145, %v1160
  %v1162 = vadd.f32 %v1146, %v1160
  %v1163 = vadd.f32 %v1147, %v1160
  %v1164 = vadd.f32 %v1148, %v1160
  %v1165 = vadd.f32 %v1149, %v1160
  %v1166 = vadd.f32 %v1150, %v1160
  %v1167 = vadd.f32 %v1151, %v1160
  %v1168 = vadd.f32 %v1152, %v1160
  %v1169 = vadd.f32 %v1153, %v1160
  %v1170 = vadd.f32 %v1154, %v1160
  %v1171 = vadd.f32 %v1155, %v1160
  %v1172 = vadd.f32 %v1156, %v1160
  %v1173 = vsel %vm80, %v1161, 0.0
  %1174 = vadd.xlane.f32.xlu0 %v1173
  %v1175 = vpop.xlane.xlu0 %1174
  %v1176 = vsel %vm80, %v1162, 0.0
  %1177 = vadd.xlane.f32.xlu0 %v1176
  %v1178 = vpop.xlane.xlu0 %1177
  %v1179 = vsel %vm80, %v1163, 0.0
  %1180 = vadd.xlane.f32.xlu0 %v1179
  %v1181 = vpop.xlane.xlu0 %1180
  %v1182 = vsel %vm80, %v1164, 0.0
  %1183 = vadd.xlane.f32.xlu0 %v1182
  %v1184 = vpop.xlane.xlu0 %1183
  %v1185 = vsel %vm80, %v1165, 0.0
  %1186 = vadd.xlane.f32.xlu0 %v1185
  %v1187 = vpop.xlane.xlu0 %1186
  %v1188 = vsel %vm80, %v1166, 0.0
  %1189 = vadd.xlane.f32.xlu0 %v1188
  %v1190 = vpop.xlane.xlu0 %1189
  %v1191 = vsel %vm80, %v1167, 0.0
  %1192 = vadd.xlane.f32.xlu0 %v1191
  %v1193 = vpop.xlane.xlu0 %1192
  %v1194 = vsel %vm80, %v1168, 0.0
  %1195 = vadd.xlane.f32.xlu0 %v1194
  %v1196 = vpop.xlane.xlu0 %1195
  %v1197 = vsel %vm80, %v1169, 0.0
  %1198 = vadd.xlane.f32.xlu0 %v1197
  %v1199 = vpop.xlane.xlu0 %1198
  %v1200 = vsel %vm80, %v1170, 0.0
  %1201 = vadd.xlane.f32.xlu0 %v1200
  %v1202 = vpop.xlane.xlu0 %1201
  %v1203 = vsel %vm80, %v1171, 0.0
  %1204 = vadd.xlane.f32.xlu0 %v1203
  %v1205 = vpop.xlane.xlu0 %1204
  %v1206 = vsel %vm80, %v1172, 0.0
  %1207 = vadd.xlane.f32.xlu0 %v1206
  %v1208 = vpop.xlane.xlu0 %1207
  %v1209 = vmul.f32 %v1175, %v102
  %v1210 = vmul.f32 %v1178, %v102
  %v1211 = vmul.f32 %v1181, %v102
  %v1212 = vmul.f32 %v1184, %v102
  %v1213 = vmul.f32 %v1187, %v102
  %v1214 = vmul.f32 %v1190, %v102
  %v1215 = vmul.f32 %v1193, %v102
  %v1216 = vmul.f32 %v1196, %v102
  %v1217 = vmul.f32 %v1199, %v102
  %v1218 = vmul.f32 %v1202, %v102
  %v1219 = vmul.f32 %v1205, %v102
  %v1220 = vmul.f32 %v1208, %v102
  %v1221 = vsub.f32 %v1161, %v1209
  %v1222 = vsub.f32 %v1162, %v1210
  %v1223 = vsub.f32 %v1163, %v1211
  %v1224 = vsub.f32 %v1164, %v1212
  %v1225 = vsub.f32 %v1165, %v1213
  %v1226 = vsub.f32 %v1166, %v1214
  %v1227 = vsub.f32 %v1167, %v1215
  %v1228 = vsub.f32 %v1168, %v1216
  %v1229 = vsub.f32 %v1169, %v1217
  %v1230 = vsub.f32 %v1170, %v1218
  %v1231 = vsub.f32 %v1171, %v1219
  %v1232 = vsub.f32 %v1172, %v1220
  %v1233 = vmul.f32 %v1221, %v1221
  %v1234 = vmul.f32 %v1222, %v1222
  %v1235 = vmul.f32 %v1223, %v1223
  %v1236 = vmul.f32 %v1224, %v1224
  %v1237 = vmul.f32 %v1225, %v1225
  %v1238 = vmul.f32 %v1226, %v1226
  %v1239 = vmul.f32 %v1227, %v1227
  %v1240 = vmul.f32 %v1228, %v1228
  %v1241 = vmul.f32 %v1229, %v1229
  %v1242 = vmul.f32 %v1230, %v1230
  %v1243 = vmul.f32 %v1231, %v1231
  %v1244 = vmul.f32 %v1232, %v1232
  %v1245 = vsel %vm80, %v1233, 0.0
  %1246 = vadd.xlane.f32.xlu0 %v1245
  %v1247 = vpop.xlane.xlu0 %1246
  %v1248 = vsel %vm80, %v1234, 0.0
  %1249 = vadd.xlane.f32.xlu0 %v1248
  %v1250 = vpop.xlane.xlu0 %1249
  %v1251 = vsel %vm80, %v1235, 0.0
  %1252 = vadd.xlane.f32.xlu0 %v1251
  %v1253 = vpop.xlane.xlu0 %1252
  %v1254 = vsel %vm80, %v1236, 0.0
  %1255 = vadd.xlane.f32.xlu0 %v1254
  %v1256 = vpop.xlane.xlu0 %1255
  %v1257 = vsel %vm80, %v1237, 0.0
  %1258 = vadd.xlane.f32.xlu0 %v1257
  %v1259 = vpop.xlane.xlu0 %1258
  %v1260 = vsel %vm80, %v1238, 0.0
  %1261 = vadd.xlane.f32.xlu0 %v1260
  %v1262 = vpop.xlane.xlu0 %1261
  %v1263 = vsel %vm80, %v1239, 0.0
  %1264 = vadd.xlane.f32.xlu0 %v1263
  %v1265 = vpop.xlane.xlu0 %1264
  %v1266 = vsel %vm80, %v1240, 0.0
  %1267 = vadd.xlane.f32.xlu0 %v1266
  %v1268 = vpop.xlane.xlu0 %1267
  %v1269 = vsel %vm80, %v1241, 0.0
  %1270 = vadd.xlane.f32.xlu0 %v1269
  %v1271 = vpop.xlane.xlu0 %1270
  %v1272 = vsel %vm80, %v1242, 0.0
  %1273 = vadd.xlane.f32.xlu0 %v1272
  %v1274 = vpop.xlane.xlu0 %1273
  %v1275 = vsel %vm80, %v1243, 0.0
  %1276 = vadd.xlane.f32.xlu0 %v1275
  %v1277 = vpop.xlane.xlu0 %1276
  %v1278 = vsel %vm80, %v1244, 0.0
  %1279 = vadd.xlane.f32.xlu0 %v1278
  %v1280 = vpop.xlane.xlu0 %1279
  %v1281 = vmul.f32 %v1247, %v102
  %v1282 = vmul.f32 %v1250, %v102
  %v1283 = vmul.f32 %v1253, %v102
  %v1284 = vmul.f32 %v1256, %v102
  %v1285 = vmul.f32 %v1259, %v102
  %v1286 = vmul.f32 %v1262, %v102
  %v1287 = vmul.f32 %v1265, %v102
  %v1288 = vmul.f32 %v1268, %v102
  %v1289 = vmul.f32 %v1271, %v102
  %v1290 = vmul.f32 %v1274, %v102
  %v1291 = vmul.f32 %v1277, %v102
  %v1292 = vmul.f32 %v1280, %v102
  %v1293 = vadd.f32 %v1281, 1e-05
  %v1294 = vadd.f32 %v1282, 1e-05
  %v1295 = vadd.f32 %v1283, 1e-05
  %v1296 = vadd.f32 %v1284, 1e-05
  %v1297 = vadd.f32 %v1285, 1e-05
  %v1298 = vadd.f32 %v1286, 1e-05
  %v1299 = vadd.f32 %v1287, 1e-05
  %v1300 = vadd.f32 %v1288, 1e-05
  %v1301 = vadd.f32 %v1289, 1e-05
  %v1302 = vadd.f32 %v1290, 1e-05
  %v1303 = vadd.f32 %v1291, 1e-05
  %v1304 = vadd.f32 %v1292, 1e-05
  %v1305 = vrsqrt.pop %v1293
  %v1306 = vrsqrt.pop %v1294
  %v1307 = vrsqrt.pop %v1295
  %v1308 = vrsqrt.pop %v1296
  %v1309 = vrsqrt.pop %v1297
  %v1310 = vrsqrt.pop %v1298
  %v1311 = vrsqrt.pop %v1299
  %v1312 = vrsqrt.pop %v1300
  %v1313 = vrsqrt.pop %v1301
  %v1314 = vrsqrt.pop %v1302
  %v1315 = vrsqrt.pop %v1303
  %v1316 = vrsqrt.pop %v1304
  %v1317 = vmul.f32 %v1221, %v1305
  %v1318 = vmul.f32 %v1222, %v1306
  %v1319 = vmul.f32 %v1223, %v1307
  %v1320 = vmul.f32 %v1224, %v1308
  %v1321 = vmul.f32 %v1225, %v1309
  %v1322 = vmul.f32 %v1226, %v1310
  %v1323 = vmul.f32 %v1227, %v1311
  %v1324 = vmul.f32 %v1228, %v1312
  %v1325 = vmul.f32 %v1229, %v1313
  %v1326 = vmul.f32 %v1230, %v1314
  %v1327 = vmul.f32 %v1231, %v1315
  %v1328 = vmul.f32 %v1232, %v1316
  %v1329 = vlaneseq
  %v1330 = vshrl.u32 %v1329, 7
  %v1331 = vsub.s32 0, %v1330
  %v1332 = vrot.slane %v16, %v1331
  %v1333 = vmul.f32 %v1317, %v1332
  %v1334 = vmul.f32 %v1318, %v1332
  %v1335 = vmul.f32 %v1319, %v1332
  %v1336 = vmul.f32 %v1320, %v1332
  %v1337 = vmul.f32 %v1321, %v1332
  %v1338 = vmul.f32 %v1322, %v1332
  %v1339 = vmul.f32 %v1323, %v1332
  %v1340 = vmul.f32 %v1324, %v1332
  %v1341 = vmul.f32 %v1325, %v1332
  %v1342 = vmul.f32 %v1326, %v1332
  %v1343 = vmul.f32 %v1327, %v1332
  %v1344 = vmul.f32 %v1328, %v1332
  %v1345 = vlaneseq
  %v1346 = vshrl.u32 %v1345, 7
  %v1347 = vsub.s32 1, %v1346
  %v1348 = vrot.slane %v16, %v1347
  %v1349 = vadd.f32 %v1333, %v1348
  %v1350 = vadd.f32 %v1334, %v1348
  %v1351 = vadd.f32 %v1335, %v1348
  %v1352 = vadd.f32 %v1336, %v1348
  %v1353 = vadd.f32 %v1337, %v1348
  %v1354 = vadd.f32 %v1338, %v1348
  %v1355 = vadd.f32 %v1339, %v1348
  %v1356 = vadd.f32 %v1340, %v1348
  %v1357 = vadd.f32 %v1341, %v1348
  %v1358 = vadd.f32 %v1342, %v1348
  %v1359 = vadd.f32 %v1343, %v1348
  %v1360 = vadd.f32 %v1344, %v1348
  %v1361 = vld [vmem:[%s2] sm:$0xff]
  %v1362 = vld [vmem:[%s2 + $0x8] sm:$0xff]
  %v1363 = vld [vmem:[%s2 + $0x10] sm:$0xff]
  %v1364 = vld [vmem:[%s2 + $0x18] sm:$0xff]
  %v1365 = vld [vmem:[%s2 + $0x20] sm:$0xff]
  %v1366 = vld [vmem:[%s2 + $0x28] sm:$0xff]
  %v1367 = vld [vmem:[%s2 + $0x30] sm:$0xff]
  %v1368 = vld [vmem:[%s2 + $0x38] sm:$0xff]
  %v1369 = vpack.c.bf16 %v1350, %v1349
  %v1370 = vpack.c.bf16 %v1352, %v1351
  %v1371 = vpack.c.bf16 %v1354, %v1353
  %v1372 = vpack.c.bf16 %v1356, %v1355
  %v1373 = vpack.c.bf16 %v1358, %v1357
  %v1374 = vpack.c.bf16 %v1360, %v1359
  %v1375 = vpack.c.bf16 %v1362, %v1361
  %v1376 = vpack.c.bf16 %v1364, %v1363
  %v1377 = vpack.c.bf16 %v1366, %v1365
  %v1378 = vpack.c.bf16 %v1368, %v1367
  %v1379 = vld [vmem:[%s2 + $0x120] sm:$0x1]
  %v1380 = vlaneseq
  %v1381 = vshrl.u32 %v1380, 7
  %v1382 = vsub.s32 0, %v1381
  %v1383 = vrot.slane %v1379, %v1382
  %v1385 = vsel %vm80, %v1369, 0
  %v1388 = vsel %vm80, %v1370, 0
  %v1391 = vsel %vm80, %v1371, 0
  %v1394 = vsel %vm80, %v1372, 0
  %v1397 = vsel %vm80, %v1373, 0
  %v1400 = vsel %vm80, %v1374, 0
  %1402 = vmatprep.subr.bf16.mxu0 0
  %1403 = vmatpush1.bf16.msra.mxu0 %v1375
  %1404 = vmatprep.subr.bf16.mxu0 0
  %1405 = vmatpush1.bf16.msra.mxu0 %v1376
  %1406 = vmatprep.subr.bf16.mxu0 0
  %1407 = vmatpush1.bf16.msra.mxu0 %v1377
  %1408 = vmatprep.subr.bf16.mxu0 0
  %1409 = vmatpush1.bf16.msra.mxu0 %v1378
  %1410 = vmatprep.subr.bf16.mxu0 0
  %1411 = vmatpush1.bf16.msra.mxu0 0
  %1412 = vmatprep.subr.bf16.mxu0 0
  %1413 = vmatpush1.bf16.msra.mxu0 0
  %1414 = vmatprep.subr.bf16.mxu0 0
  %1415 = vmatpush1.bf16.msra.mxu0 0
  %1416 = vmatprep.subr.bf16.mxu0 0
  %1417 = vmatpush1.bf16.msra.mxu0 0
  %1418 = vmatprep.subr.bf16.mxu0 0
  %1419 = vmatpush1.bf16.msra.mxu0 0
  %1420 = vmatprep.subr.bf16.mxu0 0
  %1421 = vmatpush1.bf16.msra.mxu0 0
  %1422 = vmatprep.subr.bf16.mxu0 0
  %1423 = vmatpush1.bf16.msra.mxu0 0
  %1424 = vmatprep.subr.bf16.mxu0 0
  %1425 = vmatpush1.bf16.msra.mxu0 0
  %1426 = vmatprep.subr.bf16.mxu0 0
  %1427 = vmatpush1.bf16.msra.mxu0 0
  %1428 = vmatprep.subr.bf16.mxu0 0
  %1429 = vmatpush1.bf16.msra.mxu0 0
  %1430 = vmatprep.subr.bf16.mxu0 0
  %1431 = vmatpush1.bf16.msra.mxu0 0
  %1432 = vmatprep.subr.bf16.mxu0 0
  %1433 = vmatpush1.bf16.msra.mxu0 0
  %1434 = vmatprep.mubr.bf16.mxu0 0
  %1435 = vmatmul.mubr.bf16.gmra.mrb[0].mxu0 %v1385
  %v1436 = vpop.f32.mrb[0].mxu0
  %v1437 = vadd.f32 %v1383, %v1436
  %v1438 = vpop.f32.mrb[0].mxu0
  %v1439 = vpop.f32.mrb[0].mxu0
  %v1440 = vadd.f32 %v1383, %v1439
  %v1441 = vpop.f32.mrb[0].mxu0
  %1442 = vmatprep.mubr.bf16.mxu0 0
  %1443 = vmatmul.mubr.bf16.gmra.mrb[0].mxu0 %v1388
  %v1444 = vpop.f32.mrb[0].mxu0
  %v1445 = vadd.f32 %v1383, %v1444
  %v1446 = vpop.f32.mrb[0].mxu0
  %v1447 = vpop.f32.mrb[0].mxu0
  %v1448 = vadd.f32 %v1383, %v1447
  %v1449 = vpop.f32.mrb[0].mxu0
  %1450 = vmatprep.mubr.bf16.mxu0 0
  %1451 = vmatmul.mubr.bf16.gmra.mrb[0].mxu0 %v1391
  %v1452 = vpop.f32.mrb[0].mxu0
  %v1453 = vadd.f32 %v1383, %v1452
  %v1454 = vpop.f32.mrb[0].mxu0
  %v1455 = vpop.f32.mrb[0].mxu0
  %v1456 = vadd.f32 %v1383, %v1455
  %v1457 = vpop.f32.mrb[0].mxu0
  %1458 = vmatprep.mubr.bf16.mxu0 0
  %1459 = vmatmul.mubr.bf16.gmra.mrb[0].mxu0 %v1394
  %v1460 = vpop.f32.mrb[0].mxu0
  %v1461 = vadd.f32 %v1383, %v1460
  %v1462 = vpop.f32.mrb[0].mxu0
  %v1463 = vpop.f32.mrb[0].mxu0
  %v1464 = vadd.f32 %v1383, %v1463
  %v1465 = vpop.f32.mrb[0].mxu0
  %1466 = vmatprep.mubr.bf16.mxu0 0
  %1467 = vmatmul.mubr.bf16.gmra.mrb[0].mxu0 %v1397
  %v1468 = vpop.f32.mrb[0].mxu0
  %v1469 = vadd.f32 %v1383, %v1468
  %v1470 = vpop.f32.mrb[0].mxu0
  %v1471 = vpop.f32.mrb[0].mxu0
  %v1472 = vadd.f32 %v1383, %v1471
  %v1473 = vpop.f32.mrb[0].mxu0
  %1474 = vmatprep.mubr.bf16.mxu0 0
  %1475 = vmatmul.mubr.bf16.gmra.mrb[0].mxu0 %v1400
  %v1476 = vpop.f32.mrb[0].mxu0
  %v1477 = vadd.f32 %v1383, %v1476
  %v1478 = vpop.f32.mrb[0].mxu0
  %v1479 = vpop.f32.mrb[0].mxu0
  %v1480 = vadd.f32 %v1383, %v1479
  %v1481 = vpop.f32.mrb[0].mxu0
  %1482 = vdwg.mxu0
  %v1483 = vmul.f32 %v1437, 0.5
  %v1484 = vmul.f32 %v1440, 0.5
  %v1485 = vmul.f32 %v1445, 0.5
  %v1486 = vmul.f32 %v1448, 0.5
  %v1487 = vmul.f32 %v1453, 0.5
  %v1488 = vmul.f32 %v1456, 0.5
  %v1489 = vmul.f32 %v1461, 0.5
  %v1490 = vmul.f32 %v1464, 0.5
  %v1491 = vmul.f32 %v1469, 0.5
  %v1492 = vmul.f32 %v1472, 0.5
  %v1493 = vmul.f32 %v1477, 0.5
  %v1494 = vmul.f32 %v1480, 0.5
  %v1495 = vmul.f32 %v1437, 0.044715
  %v1496 = vmul.f32 %v1440, 0.044715
  %v1497 = vmul.f32 %v1445, 0.044715
  %v1498 = vmul.f32 %v1448, 0.044715
  %v1499 = vmul.f32 %v1453, 0.044715
  %v1500 = vmul.f32 %v1456, 0.044715
  %v1501 = vmul.f32 %v1461, 0.044715
  %v1502 = vmul.f32 %v1464, 0.044715
  %v1503 = vmul.f32 %v1469, 0.044715
  %v1504 = vmul.f32 %v1472, 0.044715
  %v1505 = vmul.f32 %v1477, 0.044715
  %v1506 = vmul.f32 %v1480, 0.044715
  %v1507 = vmul.f32 %v1495, %v1437
  %v1508 = vmul.f32 %v1496, %v1440
  %v1509 = vmul.f32 %v1497, %v1445
  %v1510 = vmul.f32 %v1498, %v1448
  %v1511 = vmul.f32 %v1499, %v1453
  %v1512 = vmul.f32 %v1500, %v1456
  %v1513 = vmul.f32 %v1501, %v1461
  %v1514 = vmul.f32 %v1502, %v1464
  %v1515 = vmul.f32 %v1503, %v1469
  %v1516 = vmul.f32 %v1504, %v1472
  %v1517 = vmul.f32 %v1505, %v1477
  %v1518 = vmul.f32 %v1506, %v1480
  %v1519 = vmul.f32 %v1507, %v1437
  %v1520 = vmul.f32 %v1508, %v1440
  %v1521 = vmul.f32 %v1509, %v1445
  %v1522 = vmul.f32 %v1510, %v1448
  %v1523 = vmul.f32 %v1511, %v1453
  %v1524 = vmul.f32 %v1512, %v1456
  %v1525 = vmul.f32 %v1513, %v1461
  %v1526 = vmul.f32 %v1514, %v1464
  %v1527 = vmul.f32 %v1515, %v1469
  %v1528 = vmul.f32 %v1516, %v1472
  %v1529 = vmul.f32 %v1517, %v1477
  %v1530 = vmul.f32 %v1518, %v1480
  %v1531 = vadd.f32 %v1437, %v1519
  %v1532 = vadd.f32 %v1440, %v1520
  %v1533 = vadd.f32 %v1445, %v1521
  %v1534 = vadd.f32 %v1448, %v1522
  %v1535 = vadd.f32 %v1453, %v1523
  %v1536 = vadd.f32 %v1456, %v1524
  %v1537 = vadd.f32 %v1461, %v1525
  %v1538 = vadd.f32 %v1464, %v1526
  %v1539 = vadd.f32 %v1469, %v1527
  %v1540 = vadd.f32 %v1472, %v1528
  %v1541 = vadd.f32 %v1477, %v1529
  %v1542 = vadd.f32 %v1480, %v1530
  %v1543 = vmul.f32 %v1531, 0.7978846
  %v1544 = vmul.f32 %v1532, 0.7978846
  %v1545 = vmul.f32 %v1533, 0.7978846
  %v1546 = vmul.f32 %v1534, 0.7978846
  %v1547 = vmul.f32 %v1535, 0.7978846
  %v1548 = vmul.f32 %v1536, 0.7978846
  %v1549 = vmul.f32 %v1537, 0.7978846
  %v1550 = vmul.f32 %v1538, 0.7978846
  %v1551 = vmul.f32 %v1539, 0.7978846
  %v1552 = vmul.f32 %v1540, 0.7978846
  %v1553 = vmul.f32 %v1541, 0.7978846
  %v1554 = vmul.f32 %v1542, 0.7978846
  %v1555 = vtanh.pop %v1543
  %v1556 = vtanh.pop %v1544
  %v1557 = vtanh.pop %v1545
  %v1558 = vtanh.pop %v1546
  %v1559 = vtanh.pop %v1547
  %v1560 = vtanh.pop %v1548
  %v1561 = vtanh.pop %v1549
  %v1562 = vtanh.pop %v1550
  %v1563 = vtanh.pop %v1551
  %v1564 = vtanh.pop %v1552
  %v1565 = vtanh.pop %v1553
  %v1566 = vtanh.pop %v1554
  %v1567 = vadd.f32 %v1555, 1.0
  %v1568 = vadd.f32 %v1556, 1.0
  %v1569 = vadd.f32 %v1557, 1.0
  %v1570 = vadd.f32 %v1558, 1.0
  %v1571 = vadd.f32 %v1559, 1.0
  %v1572 = vadd.f32 %v1560, 1.0
  %v1573 = vadd.f32 %v1561, 1.0
  %v1574 = vadd.f32 %v1562, 1.0
  %v1575 = vadd.f32 %v1563, 1.0
  %v1576 = vadd.f32 %v1564, 1.0
  %v1577 = vadd.f32 %v1565, 1.0
  %v1578 = vadd.f32 %v1566, 1.0
  %v1579 = vmul.f32 %v1483, %v1567
  %v1580 = vmul.f32 %v1484, %v1568
  %v1581 = vmul.f32 %v1485, %v1569
  %v1582 = vmul.f32 %v1486, %v1570
  %v1583 = vmul.f32 %v1487, %v1571
  %v1584 = vmul.f32 %v1488, %v1572
  %v1585 = vmul.f32 %v1489, %v1573
  %v1586 = vmul.f32 %v1490, %v1574
  %v1587 = vmul.f32 %v1491, %v1575
  %v1588 = vmul.f32 %v1492, %v1576
  %v1589 = vmul.f32 %v1493, %v1577
  %v1590 = vmul.f32 %v1494, %v1578
  %v1591 = vld [vmem:[%s1 + $0x130] sm:$0xff]
  %v1592 = vld [vmem:[%s1 + $0x138] sm:$0xff]
  %v1593 = vld [vmem:[%s1 + $0x140] sm:$0xff]
  %v1594 = vld [vmem:[%s1 + $0x148] sm:$0xff]
  %v1595 = vld [vmem:[%s1 + $0x150] sm:$0xff]
  %v1596 = vld [vmem:[%s1 + $0x158] sm:$0xff]
  %v1597 = vld [vmem:[%s1 + $0x160] sm:$0xff]
  %v1598 = vld [vmem:[%s1 + $0x168] sm:$0xff]
  %v1599 = vld [vmem:[%s1 + $0x170] sm:$0xff]
  %v1600 = vld [vmem:[%s1 + $0x178] sm:$0xff]
  %v1601 = vld [vmem:[%s1 + $0x180] sm:$0xff]
  %v1602 = vld [vmem:[%s1 + $0x188] sm:$0xff]
  %v1603 = vld [vmem:[%s1 + $0x190] sm:$0xff]
  %v1604 = vld [vmem:[%s1 + $0x198] sm:$0xff]
  %v1605 = vld [vmem:[%s1 + $0x1a0] sm:$0xff]
  %v1606 = vld [vmem:[%s1 + $0x1a8] sm:$0xff]
  %v1607 = vpack.c.bf16 %v1580, %v1579
  %v1608 = vpack.c.bf16 %v1582, %v1581
  %v1609 = vpack.c.bf16 %v1584, %v1583
  %v1610 = vpack.c.bf16 %v1586, %v1585
  %v1611 = vpack.c.bf16 %v1588, %v1587
  %v1612 = vpack.c.bf16 %v1590, %v1589
  %v1613 = vpack.c.bf16 %v1592, %v1591
  %v1614 = vpack.c.bf16 %v1594, %v1593
  %v1615 = vpack.c.bf16 %v1596, %v1595
  %v1616 = vpack.c.bf16 %v1598, %v1597
  %v1617 = vpack.c.bf16 %v1600, %v1599
  %v1618 = vpack.c.bf16 %v1602, %v1601
  %v1619 = vpack.c.bf16 %v1604, %v1603
  %v1620 = vpack.c.bf16 %v1606, %v1605
  %1621 = vmatprep.subr.bf16.mxu0 0
  %1622 = vmatpush1.bf16.msra.mxu0 %v1613
  %1623 = vmatprep.subr.bf16.mxu0 0
  %1624 = vmatpush1.bf16.msra.mxu0 %v1614
  %1625 = vmatprep.subr.bf16.mxu0 0
  %1626 = vmatpush1.bf16.msra.mxu0 %v1615
  %1627 = vmatprep.subr.bf16.mxu0 0
  %1628 = vmatpush1.bf16.msra.mxu0 %v1616
  %1629 = vmatprep.subr.bf16.mxu0 0
  %1630 = vmatpush1.bf16.msra.mxu0 %v1617
  %1631 = vmatprep.subr.bf16.mxu0 0
  %1632 = vmatpush1.bf16.msra.mxu0 %v1618
  %1633 = vmatprep.subr.bf16.mxu0 0
  %1634 = vmatpush1.bf16.msra.mxu0 %v1619
  %1635 = vmatprep.subr.bf16.mxu0 0
  %1636 = vmatpush1.bf16.msra.mxu0 %v1620
  %1637 = vmatprep.subr.bf16.mxu0 0
  %1638 = vmatpush1.bf16.msra.mxu0 0
  %1639 = vmatprep.subr.bf16.mxu0 0
  %1640 = vmatpush1.bf16.msra.mxu0 0
  %1641 = vmatprep.subr.bf16.mxu0 0
  %1642 = vmatpush1.bf16.msra.mxu0 0
  %1643 = vmatprep.subr.bf16.mxu0 0
  %1644 = vmatpush1.bf16.msra.mxu0 0
  %1645 = vmatprep.subr.bf16.mxu0 0
  %1646 = vmatpush1.bf16.msra.mxu0 0
  %1647 = vmatprep.subr.bf16.mxu0 0
  %1648 = vmatpush1.bf16.msra.mxu0 0
  %1649 = vmatprep.subr.bf16.mxu0 0
  %1650 = vmatpush1.bf16.msra.mxu0 0
  %1651 = vmatprep.subr.bf16.mxu0 0
  %1652 = vmatpush1.bf16.msra.mxu0 0
  %1653 = vmatprep.mubr.bf16.mxu0 0
  %1654 = vmatmul.mubr.bf16.gmra.mrb[0].mxu0 %v1607
  %v1655 = vpop.f32.mrb[0].mxu0
  %v1656 = vpop.f32.mrb[0].mxu0
  %v1657 = vpop.f32.mrb[0].mxu0
  %v1658 = vadd.f32 0.0, %v1657
  %v1659 = vpop.f32.mrb[0].mxu0
  %1660 = vmatprep.mubr.bf16.mxu0 0
  %1661 = vmatmul.mubr.bf16.gmra.mrb[0].mxu0 %v1608
  %v1662 = vpop.f32.mrb[0].mxu0
  %v1663 = vadd.f32 0.0, %v1662
  %v1664 = vpop.f32.mrb[0].mxu0
  %v1665 = vpop.f32.mrb[0].mxu0
  %v1666 = vadd.f32 0.0, %v1665
  %v1667 = vpop.f32.mrb[0].mxu0
  %1668 = vmatprep.mubr.bf16.mxu0 0
  %1669 = vmatmul.mubr.bf16.gmra.mrb[0].mxu0 %v1609
  %v1670 = vpop.f32.mrb[0].mxu0
  %v1671 = vadd.f32 0.0, %v1670
  %v1672 = vpop.f32.mrb[0].mxu0
  %v1673 = vpop.f32.mrb[0].mxu0
  %v1674 = vadd.f32 0.0, %v1673
  %v1675 = vpop.f32.mrb[0].mxu0
  %1676 = vmatprep.mubr.bf16.mxu0 0
  %1677 = vmatmul.mubr.bf16.gmra.mrb[0].mxu0 %v1610
  %v1678 = vpop.f32.mrb[0].mxu0
  %v1679 = vpop.f32.mrb[0].mxu0
  %v1680 = vpop.f32.mrb[0].mxu0
  %v1681 = vadd.f32 0.0, %v1680
  %v1682 = vpop.f32.mrb[0].mxu0
  %1683 = vmatprep.mubr.bf16.mxu0 0
  %1684 = vmatmul.mubr.bf16.gmra.mrb[0].mxu0 %v1611
  %v1685 = vpop.f32.mrb[0].mxu0
  %v1686 = vadd.f32 0.0, %v1685
  %v1687 = vpop.f32.mrb[0].mxu0
  %v1688 = vpop.f32.mrb[0].mxu0
  %v1689 = vadd.f32 0.0, %v1688
  %v1690 = vpop.f32.mrb[0].mxu0
  %1691 = vmatprep.mubr.bf16.mxu0 0
  %1692 = vmatmul.mubr.bf16.gmra.mrb[0].mxu0 %v1612
  %v1693 = vpop.f32.mrb[0].mxu0
  %v1694 = vadd.f32 0.0, %v1693
  %v1695 = vpop.f32.mrb[0].mxu0
  %v1696 = vpop.f32.mrb[0].mxu0
  %v1697 = vadd.f32 0.0, %v1696
  %v1698 = vpop.f32.mrb[0].mxu0
  %1699 = vdwg.mxu0
  %v1700 = vadd.f32 %v1162, %v1658
  %v1701 = vadd.f32 %v1163, %v1663
  %v1702 = vadd.f32 %v1164, %v1666
  %v1703 = vadd.f32 %v1165, %v1671
  %v1704 = vadd.f32 %v1166, %v1674
  %v1705 = vadd.f32 %v1168, %v1681
  %v1706 = vadd.f32 %v1169, %v1686
  %v1707 = vadd.f32 %v1170, %v1689
  %v1708 = vadd.f32 %v1171, %v1694
  %v1709 = vadd.f32 %v1172, %v1697
  %v1710 = vlaneseq
  %v1711 = vshrl.u32 %v1710, 7
  %v1712 = vsub.s32 5, %v1711
  %v1713 = vrot.slane %v15, %v1712
  %v1714 = vadd.f32 %v1700, %v1713
  %v1715 = vadd.f32 %v1701, %v1713
  %v1716 = vadd.f32 %v1702, %v1713
  %v1717 = vadd.f32 %v1703, %v1713
  %v1718 = vadd.f32 %v1704, %v1713
  %v1719 = vadd.f32 %v1705, %v1713
  %v1720 = vadd.f32 %v1706, %v1713
  %v1721 = vadd.f32 %v1707, %v1713
  %v1722 = vadd.f32 %v1708, %v1713
  %v1723 = vadd.f32 %v1709, %v1713
  %v1724 = vld [vmem:[%s1 + $0x1c0] sm:$0xff]
  %v1725 = vld [vmem:[%s1 + $0x1c8] sm:$0xff]
  %v1726 = vld [vmem:[%s1 + $0x1d0] sm:$0xff]
  %v1727 = vld [vmem:[%s1 + $0x1d8] sm:$0xff]
  %v1728 = vld [vmem:[%s1 + $0x1e0] sm:$0xf]
  %v1729 = vld [vmem:[%s1 + $0x1e8] sm:$0xff]
  %v1730 = vld [vmem:[%s1 + $0x1f0] sm:$0xff]
  %v1731 = vld [vmem:[%s1 + $0x1f8] sm:$0xff]
  %v1732 = vld [vmem:[%s1 + $0x200] sm:$0xff]
  %v1733 = vld [vmem:[%s1 + $0x208] sm:$0xf]
  %v1734 = vld [vmem:[%s2 + $0x40] sm:$0xff]
  %v1735 = vld [vmem:[%s2 + $0x48] sm:$0xff]
  %v1736 = vld [vmem:[%s2 + $0x50] sm:$0xff]
  %v1737 = vld [vmem:[%s2 + $0x58] sm:$0xff]
  %v1738 = vld [vmem:[%s2 + $0x60] sm:$0xff]
  %v1739 = vld [vmem:[%s2 + $0x68] sm:$0xff]
  %v1740 = vld [vmem:[%s2 + $0x70] sm:$0xff]
  %v1741 = vld [vmem:[%s2 + $0x78] sm:$0xff]
  %v1742 = vld [vmem:[%s2 + $0x80] sm:$0x1]
  %v1743 = vld [vmem:[%s2 + $0x88] sm:$0xff]
  %v1744 = vld [vmem:[%s2 + $0x90] sm:$0xff]
  %v1745 = vld [vmem:[%s2 + $0x98] sm:$0xff]
  %v1746 = vld [vmem:[%s2 + $0xa0] sm:$0xff]
  %v1747 = vld [vmem:[%s2 + $0xa8] sm:$0xf]
  %v1748 = vld [vmem:[%s2 + $0xb0] sm:$0xff]
  %v1749 = vld [vmem:[%s2 + $0xb8] sm:$0xff]
  %v1750 = vld [vmem:[%s2 + $0xc0] sm:$0xff]
  %v1751 = vld [vmem:[%s2 + $0xc8] sm:$0xff]
  %v1752 = vld [vmem:[%s2 + $0xd0] sm:$0xff]
  %v1753 = vld [vmem:[%s2 + $0xd8] sm:$0xff]
  %v1754 = vld [vmem:[%s2 + $0xe0] sm:$0xff]
  %v1755 = vld [vmem:[%s2 + $0xe8] sm:$0xf]
  %v1756 = vld [vmem:[%s2 + $0xf0] sm:$0xff]
  %v1757 = vld [vmem:[%s2 + $0xf8] sm:$0xff]
  %v1758 = vld [vmem:[%s2 + $0x100] sm:$0xff]
  %v1759 = vld [vmem:[%s2 + $0x108] sm:$0xff]
  %v1760 = vld [vmem:[%s2 + $0x110] sm:$0xff]
  %v1761 = vld [vmem:[%s2 + $0x118] sm:$0xff]
  %v1762 = vsel %vm80, %v1714, 0.0
  %1763 = vadd.xlane.f32.xlu0 %v1762
  %v1764 = vpop.xlane.xlu0 %1763
  %v1765 = vsel %vm80, %v1715, 0.0
  %1766 = vadd.xlane.f32.xlu0 %v1765
  %v1767 = vpop.xlane.xlu0 %1766
  %v1768 = vsel %vm80, %v1716, 0.0
  %1769 = vadd.xlane.f32.xlu0 %v1768
  %v1770 = vpop.xlane.xlu0 %1769
  %v1771 = vsel %vm80, %v1717, 0.0
  %1772 = vadd.xlane.f32.xlu0 %v1771
  %v1773 = vpop.xlane.xlu0 %1772
  %vm1774 = vcmask 519168
  %v1775 = vsel %vm1774, %v1718, 0.0
  %1776 = vadd.xlane.f32.xlu0 %v1775
  %v1777 = vpop.xlane.xlu0 %1776
  %v1778 = vmul.f32 %v1764, %v102
  %v1779 = vmul.f32 %v1767, %v102
  %v1780 = vmul.f32 %v1770, %v102
  %v1781 = vmul.f32 %v1773, %v102
  %v1782 = vmul.f32 %v1777, %v102
  %v1783 = vsub.f32 %v1714, %v1778
  %v1784 = vsub.f32 %v1715, %v1779
  %v1785 = vsub.f32 %v1716, %v1780
  %v1786 = vsub.f32 %v1717, %v1781
  %v1787 = vsub.f32 %v1718, %v1782
  %v1788 = vmul.f32 %v1783, %v1783
  %v1789 = vmul.f32 %v1784, %v1784
  %v1790 = vmul.f32 %v1785, %v1785
  %v1791 = vmul.f32 %v1786, %v1786
  %v1792 = vmul.f32 %v1787, %v1787
  %v1793 = vsel %vm80, %v1788, 0.0
  %1794 = vadd.xlane.f32.xlu0 %v1793
  %v1795 = vpop.xlane.xlu0 %1794
  %v1796 = vsel %vm80, %v1789, 0.0
  %1797 = vadd.xlane.f32.xlu0 %v1796
  %v1798 = vpop.xlane.xlu0 %1797
  %v1799 = vsel %vm80, %v1790, 0.0
  %1800 = vadd.xlane.f32.xlu0 %v1799
  %v1801 = vpop.xlane.xlu0 %1800
  %v1802 = vsel %vm80, %v1791, 0.0
  %1803 = vadd.xlane.f32.xlu0 %v1802
  %v1804 = vpop.xlane.xlu0 %1803
  %v1805 = vsel %vm1774, %v1792, 0.0
  %1806 = vadd.xlane.f32.xlu0 %v1805
  %v1807 = vpop.xlane.xlu0 %1806
  %v1808 = vmul.f32 %v1795, %v102
  %v1809 = vmul.f32 %v1798, %v102
  %v1810 = vmul.f32 %v1801, %v102
  %v1811 = vmul.f32 %v1804, %v102
  %v1812 = vmul.f32 %v1807, %v102
  %v1813 = vadd.f32 %v1808, 1e-05
  %v1814 = vadd.f32 %v1809, 1e-05
  %v1815 = vadd.f32 %v1810, 1e-05
  %v1816 = vadd.f32 %v1811, 1e-05
  %v1817 = vadd.f32 %v1812, 1e-05
  %v1818 = vrsqrt.pop %v1813
  %v1819 = vrsqrt.pop %v1814
  %v1820 = vrsqrt.pop %v1815
  %v1821 = vrsqrt.pop %v1816
  %v1822 = vrsqrt.pop %v1817
  %v1823 = vmul.f32 %v1783, %v1818
  %v1824 = vmul.f32 %v1784, %v1819
  %v1825 = vmul.f32 %v1785, %v1820
  %v1826 = vmul.f32 %v1786, %v1821
  %v1827 = vmul.f32 %v1787, %v1822
  %v1828 = vmul.f32 %v1823, %v1724
  %v1829 = vmul.f32 %v1824, %v1725
  %v1830 = vmul.f32 %v1825, %v1726
  %v1831 = vmul.f32 %v1826, %v1727
  %v1832 = vmul.f32 %v1827, %v1728
  %v1833 = vadd.f32 %v1828, %v1729
  %v1834 = vadd.f32 %v1829, %v1730
  %v1835 = vadd.f32 %v1830, %v1731
  %v1836 = vadd.f32 %v1831, %v1732
  %v1837 = vadd.f32 %v1832, %v1733
  %v1838 = vpack.c.bf16 %v1834, %v1833
  %v1839 = vpack.c.bf16 %v1836, %v1835
  %v1840 = vpack.c.bf16 %v1837, %v1837
  %v1841 = vpack.c.bf16 %v1735, %v1734
  %v1842 = vpack.c.bf16 %v1737, %v1736
  %v1843 = vpack.c.bf16 %v1739, %v1738
  %v1844 = vpack.c.bf16 %v1741, %v1740
  %v1845 = vlaneseq
  %v1846 = vshrl.u32 %v1845, 7
  %v1847 = vsub.s32 0, %v1846
  %v1848 = vrot.slane %v1742, %v1847
  %v1850 = vsel %vm80, %v1838, 0
  %v1853 = vsel %vm80, %v1839, 0
  %v1856 = vsel %vm80, %v1840, 0
  %1858 = vmatprep.subr.bf16.mxu0 0
  %1859 = vmatpush1.bf16.msra.mxu0 %v1841
  %1860 = vmatprep.subr.bf16.mxu0 0
  %1861 = vmatpush1.bf16.msra.mxu0 %v1842
  %1862 = vmatprep.subr.bf16.mxu0 0
  %1863 = vmatpush1.bf16.msra.mxu0 %v1843
  %1864 = vmatprep.subr.bf16.mxu0 0
  %1865 = vmatpush1.bf16.msra.mxu0 %v1844
  %1866 = vmatprep.subr.bf16.mxu0 0
  %1867 = vmatpush1.bf16.msra.mxu0 0
  %1868 = vmatprep.subr.bf16.mxu0 0
  %1869 = vmatpush1.bf16.msra.mxu0 0
  %1870 = vmatprep.subr.bf16.mxu0 0
  %1871 = vmatpush1.bf16.msra.mxu0 0
  %1872 = vmatprep.subr.bf16.mxu0 0
  %1873 = vmatpush1.bf16.msra.mxu0 0
  %1874 = vmatprep.subr.bf16.mxu0 0
  %1875 = vmatpush1.bf16.msra.mxu0 0
  %1876 = vmatprep.subr.bf16.mxu0 0
  %1877 = vmatpush1.bf16.msra.mxu0 0
  %1878 = vmatprep.subr.bf16.mxu0 0
  %1879 = vmatpush1.bf16.msra.mxu0 0
  %1880 = vmatprep.subr.bf16.mxu0 0
  %1881 = vmatpush1.bf16.msra.mxu0 0
  %1882 = vmatprep.subr.bf16.mxu0 0
  %1883 = vmatpush1.bf16.msra.mxu0 0
  %1884 = vmatprep.subr.bf16.mxu0 0
  %1885 = vmatpush1.bf16.msra.mxu0 0
  %1886 = vmatprep.subr.bf16.mxu0 0
  %1887 = vmatpush1.bf16.msra.mxu0 0
  %1888 = vmatprep.subr.bf16.mxu0 0
  %1889 = vmatpush1.bf16.msra.mxu0 0
  %1890 = vmatprep.mubr.bf16.mxu0 0
  %1891 = vmatmul.mubr.bf16.gmra.mrb[0].mxu0 %v1850
  %v1892 = vpop.f32.mrb[0].mxu0
  %v1893 = vadd.f32 %v1848, %v1892
  %v1894 = vpop.f32.mrb[0].mxu0
  %v1895 = vpop.f32.mrb[0].mxu0
  %v1896 = vadd.f32 %v1848, %v1895
  %v1897 = vpop.f32.mrb[0].mxu0
  %1898 = vmatprep.mubr.bf16.mxu0 0
  %1899 = vmatmul.mubr.bf16.gmra.mrb[0].mxu0 %v1853
  %v1900 = vpop.f32.mrb[0].mxu0
  %v1901 = vadd.f32 %v1848, %v1900
  %v1902 = vpop.f32.mrb[0].mxu0
  %v1903 = vpop.f32.mrb[0].mxu0
  %v1904 = vadd.f32 %v1848, %v1903
  %v1905 = vpop.f32.mrb[0].mxu0
  %1906 = vmatprep.mubr.bf16.mxu0 0
  %1907 = vmatmul.mubr.bf16.gmra.mrb[0].mxu0 %v1856
  %v1908 = vpop.f32.mrb[0].mxu0
  %v1909 = vadd.f32 %v1848, %v1908
  %v1910 = vpop.f32.mrb[0].mxu0
  %v1911 = vpop.f32.mrb[0].mxu0
  %v1912 = vpop.f32.mrb[0].mxu0
  %1913 = vdwg.mxu0
  %v1914 = vmul.f32 %v1893, %v1743
  %v1915 = vmul.f32 %v1896, %v1744
  %v1916 = vmul.f32 %v1901, %v1745
  %v1917 = vmul.f32 %v1904, %v1746
  %v1918 = vmul.f32 %v1909, %v1747
  %v1919 = vpack.c.bf16 %v1749, %v1748
  %v1920 = vpack.c.bf16 %v1750, %v1750
  %v1921 = vpack.c.bf16 %v1915, %v1914
  %v1922 = vpack.c.bf16 %v1917, %v1916
  %v1923 = vpack.c.bf16 %v1918, %v1918
  %1924 = vmatprep.subr.bf16.mxu0 0
  %1925 = vmatpush1.bf16.xpose.msra.mxu0 %v1921
  %1926 = vmatprep.subr.bf16.mxu0 0
  %1927 = vmatpush1.bf16.xpose.msra.mxu0 %v1922
  %1928 = vmatprep.subr.bf16.mxu0 0
  %1929 = vmatpush1.bf16.xpose.msra.mxu0 %v1923
  %1930 = vmatprep.subr.bf16.mxu0 0
  %1931 = vmatpush1.bf16.xpose.msra.mxu0 0
  %1932 = vmatprep.subr.bf16.mxu0 0
  %1933 = vmatpush1.bf16.xpose.msra.mxu0 0
  %1934 = vmatprep.subr.bf16.mxu0 0
  %1935 = vmatpush1.bf16.xpose.msra.mxu0 0
  %1936 = vmatprep.subr.bf16.mxu0 0
  %1937 = vmatpush1.bf16.xpose.msra.mxu0 0
  %1938 = vmatprep.subr.bf16.mxu0 0
  %1939 = vmatpush1.bf16.xpose.msra.mxu0 0
  %1940 = vmatprep.subr.bf16.mxu0 0
  %1941 = vmatpush1.bf16.xpose.msra.mxu0 0
  %1942 = vmatprep.subr.bf16.mxu0 0
  %1943 = vmatpush1.bf16.xpose.msra.mxu0 0
  %1944 = vmatprep.subr.bf16.mxu0 0
  %1945 = vmatpush1.bf16.xpose.msra.mxu0 0
  %1946 = vmatprep.subr.bf16.mxu0 0
  %1947 = vmatpush1.bf16.xpose.msra.mxu0 0
  %1948 = vmatprep.subr.bf16.mxu0 0
  %1949 = vmatpush1.bf16.xpose.msra.mxu0 0
  %1950 = vmatprep.subr.bf16.mxu0 0
  %1951 = vmatpush1.bf16.xpose.msra.mxu0 0
  %1952 = vmatprep.subr.bf16.mxu0 0
  %1953 = vmatpush1.bf16.xpose.msra.mxu0 0
  %1954 = vmatprep.subr.bf16.mxu0 0
  %1955 = vmatpush1.bf16.xpose.msra.mxu0 0
  %1956 = vmatprep.mubr.bf16.mxu0 0
  %1957 = vmatmul.mubr.bf16.gmra.mrb[0].mxu0 %v1919
  %v1958 = vpop.f32.mrb[0].mxu0
  %v1959 = vadd.f32 0.0, %v1958
  %v1960 = vpop.f32.mrb[0].mxu0
  %v1961 = vpop.f32.mrb[0].mxu0
  %v1962 = vadd.f32 0.0, %v1961
  %v1963 = vpop.f32.mrb[0].mxu0
  %1964 = vmatprep.mubr.bf16.mxu0 0
  %1965 = vmatmul.mubr.bf16.gmra.mrb[0].mxu0 %v1920
  %v1966 = vpop.f32.mrb[0].mxu0
  %v1967 = vadd.f32 0.0, %v1966
  %v1968 = vpop.f32.mrb[0].mxu0
  %v1969 = vpop.f32.mrb[0].mxu0
  %v1970 = vpop.f32.mrb[0].mxu0
  %1971 = vdwg.mxu0
  %v1972 = vpack.c.bf16 %v1962, %v1959
  %v1973 = vpack.c.bf16 %v1967, %v1967
  %v1974 = vpack.c.bf16 %v1752, %v1751
  %v1975 = vpack.c.bf16 %v1754, %v1753
  %v1976 = vpack.c.bf16 %v1755, %v1755
  %vm1977 = vcmask 293888
  %v1979 = vsel %vm1977, %v1972, 0
  %v1982 = vsel %vm1977, %v1973, 0
  %vm1984 = vcmask 1041408
  %v1986 = vsel %vm1984, %v1976, 0
  %1988 = vmatprep.subr.bf16.mxu0 0
  %1989 = vmatpush1.bf16.msra.mxu0 %v1974
  %1990 = vmatprep.subr.bf16.mxu0 0
  %1991 = vmatpush1.bf16.msra.mxu0 %v1975
  %1992 = vmatprep.subr.bf16.mxu0 0
  %1993 = vmatpush1.bf16.msra.mxu0 %v1986
  %1994 = vmatprep.subr.bf16.mxu0 0
  %1995 = vmatpush1.bf16.msra.mxu0 0
  %1996 = vmatprep.subr.bf16.mxu0 0
  %1997 = vmatpush1.bf16.msra.mxu0 0
  %1998 = vmatprep.subr.bf16.mxu0 0
  %1999 = vmatpush1.bf16.msra.mxu0 0
  %2000 = vmatprep.subr.bf16.mxu0 0
  %2001 = vmatpush1.bf16.msra.mxu0 0
  %2002 = vmatprep.subr.bf16.mxu0 0
  %2003 = vmatpush1.bf16.msra.mxu0 0
  %2004 = vmatprep.subr.bf16.mxu0 0
  %2005 = vmatpush1.bf16.msra.mxu0 0
  %2006 = vmatprep.subr.bf16.mxu0 0
  %2007 = vmatpush1.bf16.msra.mxu0 0
  %2008 = vmatprep.subr.bf16.mxu0 0
  %2009 = vmatpush1.bf16.msra.mxu0 0
  %2010 = vmatprep.subr.bf16.mxu0 0
  %2011 = vmatpush1.bf16.msra.mxu0 0
  %2012 = vmatprep.subr.bf16.mxu0 0
  %2013 = vmatpush1.bf16.msra.mxu0 0
  %2014 = vmatprep.subr.bf16.mxu0 0
  %2015 = vmatpush1.bf16.msra.mxu0 0
  %2016 = vmatprep.subr.bf16.mxu0 0
  %2017 = vmatpush1.bf16.msra.mxu0 0
  %2018 = vmatprep.subr.bf16.mxu0 0
  %2019 = vmatpush1.bf16.msra.mxu0 0
  %2020 = vmatprep.mubr.bf16.mxu0 0
  %2021 = vmatmul.mubr.bf16.gmra.mrb[0].mxu0 %v1979
  %v2022 = vpop.f32.mrb[0].mxu0
  %v2023 = vadd.f32 0.0, %v2022
  %v2024 = vpop.f32.mrb[0].mxu0
  %v2025 = vpop.f32.mrb[0].mxu0
  %v2026 = vadd.f32 0.0, %v2025
  %v2027 = vpop.f32.mrb[0].mxu0
  %2028 = vmatprep.mubr.bf16.mxu0 0
  %2029 = vmatmul.mubr.bf16.gmra.mrb[0].mxu0 %v1982
  %v2030 = vpop.f32.mrb[0].mxu0
  %v2031 = vadd.f32 0.0, %v2030
  %v2032 = vpop.f32.mrb[0].mxu0
  %v2033 = vpop.f32.mrb[0].mxu0
  %v2034 = vpop.f32.mrb[0].mxu0
  %2035 = vdwg.mxu0
  %v2036 = vmul.f32 %v1756, %v2023
  %v2037 = vmul.f32 %v1757, %v2026
  %v2038 = vmul.f32 %v1758, %v2031
  %v2039 = vmul.f32 %v2036, %v2036
  %v2040 = vmul.f32 %v2037, %v2037
  %v2041 = vmul.f32 %v2038, %v2038
  %v2042 = vadd.f32 %v2039, %v2040
  %v2043 = vadd.f32 %v2042, %v2041
  %v2044 = vrot.slane %v2043, 4
  %v2045 = vadd.f32 %v2043, %v2044
  %v2046 = vrot.slane %v2045, 2
  %v2047 = vadd.f32 %v2045, %v2046
  %v2048 = vrot.slane %v2047, 1
  %v2049 = vadd.f32 %v2047, %v2048
  %v2050 = vadd.f32 %v2049, 1e-24
  %v2051 = vrsqrt.pop %v2050
  %v2052 = vmul.f32 %v2036, %v2051
  %v2053 = vmul.f32 %v2037, %v2051
  %v2054 = vmul.f32 %v2038, %v2051
  %v2055 = vadd.f32 %v2052, %v1759
  %v2056 = vadd.f32 %v2053, %v1760
  %v2057 = vadd.f32 %v2054, %v1761
  %2058 = vst [vmem:[%s3] sm:$0xff] %v2055
  %2059 = vst [vmem:[%s3 + $0x8] sm:$0xff] %v2056
  %2060 = vst [vmem:[%s3 + $0x10] sm:$0xff] %v2057
  %v2061 = vsel %vm80, %v1719, 0.0
  %2062 = vadd.xlane.f32.xlu0 %v2061
  %v2063 = vpop.xlane.xlu0 %2062
  %v2064 = vsel %vm80, %v1720, 0.0
  %2065 = vadd.xlane.f32.xlu0 %v2064
  %v2066 = vpop.xlane.xlu0 %2065
  %v2067 = vsel %vm80, %v1721, 0.0
  %2068 = vadd.xlane.f32.xlu0 %v2067
  %v2069 = vpop.xlane.xlu0 %2068
  %v2070 = vsel %vm80, %v1722, 0.0
  %2071 = vadd.xlane.f32.xlu0 %v2070
  %v2072 = vpop.xlane.xlu0 %2071
  %v2073 = vsel %vm1774, %v1723, 0.0
  %2074 = vadd.xlane.f32.xlu0 %v2073
  %v2075 = vpop.xlane.xlu0 %2074
  %v2076 = vmul.f32 %v2063, %v102
  %v2077 = vmul.f32 %v2066, %v102
  %v2078 = vmul.f32 %v2069, %v102
  %v2079 = vmul.f32 %v2072, %v102
  %v2080 = vmul.f32 %v2075, %v102
  %v2081 = vsub.f32 %v1719, %v2076
  %v2082 = vsub.f32 %v1720, %v2077
  %v2083 = vsub.f32 %v1721, %v2078
  %v2084 = vsub.f32 %v1722, %v2079
  %v2085 = vsub.f32 %v1723, %v2080
  %v2086 = vmul.f32 %v2081, %v2081
  %v2087 = vmul.f32 %v2082, %v2082
  %v2088 = vmul.f32 %v2083, %v2083
  %v2089 = vmul.f32 %v2084, %v2084
  %v2090 = vmul.f32 %v2085, %v2085
  %v2091 = vsel %vm80, %v2086, 0.0
  %2092 = vadd.xlane.f32.xlu0 %v2091
  %v2093 = vpop.xlane.xlu0 %2092
  %v2094 = vsel %vm80, %v2087, 0.0
  %2095 = vadd.xlane.f32.xlu0 %v2094
  %v2096 = vpop.xlane.xlu0 %2095
  %v2097 = vsel %vm80, %v2088, 0.0
  %2098 = vadd.xlane.f32.xlu0 %v2097
  %v2099 = vpop.xlane.xlu0 %2098
  %v2100 = vsel %vm80, %v2089, 0.0
  %2101 = vadd.xlane.f32.xlu0 %v2100
  %v2102 = vpop.xlane.xlu0 %2101
  %v2103 = vsel %vm1774, %v2090, 0.0
  %2104 = vadd.xlane.f32.xlu0 %v2103
  %v2105 = vpop.xlane.xlu0 %2104
  %v2106 = vmul.f32 %v2093, %v102
  %v2107 = vmul.f32 %v2096, %v102
  %v2108 = vmul.f32 %v2099, %v102
  %v2109 = vmul.f32 %v2102, %v102
  %v2110 = vmul.f32 %v2105, %v102
  %v2111 = vadd.f32 %v2106, 1e-05
  %v2112 = vadd.f32 %v2107, 1e-05
  %v2113 = vadd.f32 %v2108, 1e-05
  %v2114 = vadd.f32 %v2109, 1e-05
  %v2115 = vadd.f32 %v2110, 1e-05
  %v2116 = vrsqrt.pop %v2111
  %v2117 = vrsqrt.pop %v2112
  %v2118 = vrsqrt.pop %v2113
  %v2119 = vrsqrt.pop %v2114
  %v2120 = vrsqrt.pop %v2115
  %v2121 = vmul.f32 %v2081, %v2116
  %v2122 = vmul.f32 %v2082, %v2117
  %v2123 = vmul.f32 %v2083, %v2118
  %v2124 = vmul.f32 %v2084, %v2119
  %v2125 = vmul.f32 %v2085, %v2120
  %v2126 = vmul.f32 %v2121, %v1724
  %v2127 = vmul.f32 %v2122, %v1725
  %v2128 = vmul.f32 %v2123, %v1726
  %v2129 = vmul.f32 %v2124, %v1727
  %v2130 = vmul.f32 %v2125, %v1728
  %v2131 = vadd.f32 %v2126, %v1729
  %v2132 = vadd.f32 %v2127, %v1730
  %v2133 = vadd.f32 %v2128, %v1731
  %v2134 = vadd.f32 %v2129, %v1732
  %v2135 = vadd.f32 %v2130, %v1733
  %v2136 = vpack.c.bf16 %v2132, %v2131
  %v2137 = vpack.c.bf16 %v2134, %v2133
  %v2138 = vpack.c.bf16 %v2135, %v2135
  %v2140 = vsel %vm80, %v2136, 0
  %v2143 = vsel %vm80, %v2137, 0
  %v2146 = vsel %vm80, %v2138, 0
  %2148 = vmatprep.subr.bf16.mxu0 0
  %2149 = vmatpush1.bf16.msra.mxu0 %v1841
  %2150 = vmatprep.subr.bf16.mxu0 0
  %2151 = vmatpush1.bf16.msra.mxu0 %v1842
  %2152 = vmatprep.subr.bf16.mxu0 0
  %2153 = vmatpush1.bf16.msra.mxu0 %v1843
  %2154 = vmatprep.subr.bf16.mxu0 0
  %2155 = vmatpush1.bf16.msra.mxu0 %v1844
  %2156 = vmatprep.subr.bf16.mxu0 0
  %2157 = vmatpush1.bf16.msra.mxu0 0
  %2158 = vmatprep.subr.bf16.mxu0 0
  %2159 = vmatpush1.bf16.msra.mxu0 0
  %2160 = vmatprep.subr.bf16.mxu0 0
  %2161 = vmatpush1.bf16.msra.mxu0 0
  %2162 = vmatprep.subr.bf16.mxu0 0
  %2163 = vmatpush1.bf16.msra.mxu0 0
  %2164 = vmatprep.subr.bf16.mxu0 0
  %2165 = vmatpush1.bf16.msra.mxu0 0
  %2166 = vmatprep.subr.bf16.mxu0 0
  %2167 = vmatpush1.bf16.msra.mxu0 0
  %2168 = vmatprep.subr.bf16.mxu0 0
  %2169 = vmatpush1.bf16.msra.mxu0 0
  %2170 = vmatprep.subr.bf16.mxu0 0
  %2171 = vmatpush1.bf16.msra.mxu0 0
  %2172 = vmatprep.subr.bf16.mxu0 0
  %2173 = vmatpush1.bf16.msra.mxu0 0
  %2174 = vmatprep.subr.bf16.mxu0 0
  %2175 = vmatpush1.bf16.msra.mxu0 0
  %2176 = vmatprep.subr.bf16.mxu0 0
  %2177 = vmatpush1.bf16.msra.mxu0 0
  %2178 = vmatprep.subr.bf16.mxu0 0
  %2179 = vmatpush1.bf16.msra.mxu0 0
  %2180 = vmatprep.mubr.bf16.mxu0 0
  %2181 = vmatmul.mubr.bf16.gmra.mrb[0].mxu0 %v2140
  %v2182 = vpop.f32.mrb[0].mxu0
  %v2183 = vadd.f32 %v1848, %v2182
  %v2184 = vpop.f32.mrb[0].mxu0
  %v2185 = vpop.f32.mrb[0].mxu0
  %v2186 = vadd.f32 %v1848, %v2185
  %v2187 = vpop.f32.mrb[0].mxu0
  %2188 = vmatprep.mubr.bf16.mxu0 0
  %2189 = vmatmul.mubr.bf16.gmra.mrb[0].mxu0 %v2143
  %v2190 = vpop.f32.mrb[0].mxu0
  %v2191 = vadd.f32 %v1848, %v2190
  %v2192 = vpop.f32.mrb[0].mxu0
  %v2193 = vpop.f32.mrb[0].mxu0
  %v2194 = vadd.f32 %v1848, %v2193
  %v2195 = vpop.f32.mrb[0].mxu0
  %2196 = vmatprep.mubr.bf16.mxu0 0
  %2197 = vmatmul.mubr.bf16.gmra.mrb[0].mxu0 %v2146
  %v2198 = vpop.f32.mrb[0].mxu0
  %v2199 = vadd.f32 %v1848, %v2198
  %v2200 = vpop.f32.mrb[0].mxu0
  %v2201 = vpop.f32.mrb[0].mxu0
  %v2202 = vpop.f32.mrb[0].mxu0
  %2203 = vdwg.mxu0
  %v2204 = vmul.f32 %v2183, %v1743
  %v2205 = vmul.f32 %v2186, %v1744
  %v2206 = vmul.f32 %v2191, %v1745
  %v2207 = vmul.f32 %v2194, %v1746
  %v2208 = vmul.f32 %v2199, %v1747
  %v2209 = vpack.c.bf16 %v2205, %v2204
  %v2210 = vpack.c.bf16 %v2207, %v2206
  %v2211 = vpack.c.bf16 %v2208, %v2208
  %2212 = vmatprep.subr.bf16.mxu0 0
  %2213 = vmatpush1.bf16.xpose.msra.mxu0 %v2209
  %2214 = vmatprep.subr.bf16.mxu0 0
  %2215 = vmatpush1.bf16.xpose.msra.mxu0 %v2210
  %2216 = vmatprep.subr.bf16.mxu0 0
  %2217 = vmatpush1.bf16.xpose.msra.mxu0 %v2211
  %2218 = vmatprep.subr.bf16.mxu0 0
  %2219 = vmatpush1.bf16.xpose.msra.mxu0 0
  %2220 = vmatprep.subr.bf16.mxu0 0
  %2221 = vmatpush1.bf16.xpose.msra.mxu0 0
  %2222 = vmatprep.subr.bf16.mxu0 0
  %2223 = vmatpush1.bf16.xpose.msra.mxu0 0
  %2224 = vmatprep.subr.bf16.mxu0 0
  %2225 = vmatpush1.bf16.xpose.msra.mxu0 0
  %2226 = vmatprep.subr.bf16.mxu0 0
  %2227 = vmatpush1.bf16.xpose.msra.mxu0 0
  %2228 = vmatprep.subr.bf16.mxu0 0
  %2229 = vmatpush1.bf16.xpose.msra.mxu0 0
  %2230 = vmatprep.subr.bf16.mxu0 0
  %2231 = vmatpush1.bf16.xpose.msra.mxu0 0
  %2232 = vmatprep.subr.bf16.mxu0 0
  %2233 = vmatpush1.bf16.xpose.msra.mxu0 0
  %2234 = vmatprep.subr.bf16.mxu0 0
  %2235 = vmatpush1.bf16.xpose.msra.mxu0 0
  %2236 = vmatprep.subr.bf16.mxu0 0
  %2237 = vmatpush1.bf16.xpose.msra.mxu0 0
  %2238 = vmatprep.subr.bf16.mxu0 0
  %2239 = vmatpush1.bf16.xpose.msra.mxu0 0
  %2240 = vmatprep.subr.bf16.mxu0 0
  %2241 = vmatpush1.bf16.xpose.msra.mxu0 0
  %2242 = vmatprep.subr.bf16.mxu0 0
  %2243 = vmatpush1.bf16.xpose.msra.mxu0 0
  %2244 = vmatprep.mubr.bf16.mxu0 0
  %2245 = vmatmul.mubr.bf16.gmra.mrb[0].mxu0 %v1919
  %v2246 = vpop.f32.mrb[0].mxu0
  %v2247 = vadd.f32 0.0, %v2246
  %v2248 = vpop.f32.mrb[0].mxu0
  %v2249 = vpop.f32.mrb[0].mxu0
  %v2250 = vadd.f32 0.0, %v2249
  %v2251 = vpop.f32.mrb[0].mxu0
  %2252 = vmatprep.mubr.bf16.mxu0 0
  %2253 = vmatmul.mubr.bf16.gmra.mrb[0].mxu0 %v1920
  %v2254 = vpop.f32.mrb[0].mxu0
  %v2255 = vadd.f32 0.0, %v2254
  %v2256 = vpop.f32.mrb[0].mxu0
  %v2257 = vpop.f32.mrb[0].mxu0
  %v2258 = vpop.f32.mrb[0].mxu0
  %2259 = vdwg.mxu0
  %v2260 = vpack.c.bf16 %v2250, %v2247
  %v2261 = vpack.c.bf16 %v2255, %v2255
  %v2263 = vsel %vm1977, %v2260, 0
  %v2266 = vsel %vm1977, %v2261, 0
  %2268 = vmatprep.subr.bf16.mxu0 0
  %2269 = vmatpush1.bf16.msra.mxu0 %v1974
  %2270 = vmatprep.subr.bf16.mxu0 0
  %2271 = vmatpush1.bf16.msra.mxu0 %v1975
  %2272 = vmatprep.subr.bf16.mxu0 0
  %2273 = vmatpush1.bf16.msra.mxu0 %v1986
  %2274 = vmatprep.subr.bf16.mxu0 0
  %2275 = vmatpush1.bf16.msra.mxu0 0
  %2276 = vmatprep.subr.bf16.mxu0 0
  %2277 = vmatpush1.bf16.msra.mxu0 0
  %2278 = vmatprep.subr.bf16.mxu0 0
  %2279 = vmatpush1.bf16.msra.mxu0 0
  %2280 = vmatprep.subr.bf16.mxu0 0
  %2281 = vmatpush1.bf16.msra.mxu0 0
  %2282 = vmatprep.subr.bf16.mxu0 0
  %2283 = vmatpush1.bf16.msra.mxu0 0
  %2284 = vmatprep.subr.bf16.mxu0 0
  %2285 = vmatpush1.bf16.msra.mxu0 0
  %2286 = vmatprep.subr.bf16.mxu0 0
  %2287 = vmatpush1.bf16.msra.mxu0 0
  %2288 = vmatprep.subr.bf16.mxu0 0
  %2289 = vmatpush1.bf16.msra.mxu0 0
  %2290 = vmatprep.subr.bf16.mxu0 0
  %2291 = vmatpush1.bf16.msra.mxu0 0
  %2292 = vmatprep.subr.bf16.mxu0 0
  %2293 = vmatpush1.bf16.msra.mxu0 0
  %2294 = vmatprep.subr.bf16.mxu0 0
  %2295 = vmatpush1.bf16.msra.mxu0 0
  %2296 = vmatprep.subr.bf16.mxu0 0
  %2297 = vmatpush1.bf16.msra.mxu0 0
  %2298 = vmatprep.subr.bf16.mxu0 0
  %2299 = vmatpush1.bf16.msra.mxu0 0
  %2300 = vmatprep.mubr.bf16.mxu0 0
  %2301 = vmatmul.mubr.bf16.gmra.mrb[0].mxu0 %v2263
  %v2302 = vpop.f32.mrb[0].mxu0
  %v2303 = vadd.f32 0.0, %v2302
  %v2304 = vpop.f32.mrb[0].mxu0
  %v2305 = vpop.f32.mrb[0].mxu0
  %v2306 = vadd.f32 0.0, %v2305
  %v2307 = vpop.f32.mrb[0].mxu0
  %2308 = vmatprep.mubr.bf16.mxu0 0
  %2309 = vmatmul.mubr.bf16.gmra.mrb[0].mxu0 %v2266
  %v2310 = vpop.f32.mrb[0].mxu0
  %v2311 = vadd.f32 0.0, %v2310
  %v2312 = vpop.f32.mrb[0].mxu0
  %v2313 = vpop.f32.mrb[0].mxu0
  %v2314 = vpop.f32.mrb[0].mxu0
  %2315 = vdwg.mxu0
  %v2316 = vmul.f32 %v1756, %v2303
  %v2317 = vmul.f32 %v1757, %v2306
  %v2318 = vmul.f32 %v1758, %v2311
  %v2319 = vmul.f32 %v2316, %v2316
  %v2320 = vmul.f32 %v2317, %v2317
  %v2321 = vmul.f32 %v2318, %v2318
  %v2322 = vadd.f32 %v2319, %v2320
  %v2323 = vadd.f32 %v2322, %v2321
  %v2324 = vrot.slane %v2323, 4
  %v2325 = vadd.f32 %v2323, %v2324
  %v2326 = vrot.slane %v2325, 2
  %v2327 = vadd.f32 %v2325, %v2326
  %v2328 = vrot.slane %v2327, 1
  %v2329 = vadd.f32 %v2327, %v2328
  %v2330 = vadd.f32 %v2329, 1e-24
  %v2331 = vrsqrt.pop %v2330
  %v2332 = vmul.f32 %v2316, %v2331
  %v2333 = vmul.f32 %v2317, %v2331
  %v2334 = vmul.f32 %v2318, %v2331
  %v2335 = vadd.f32 %v2332, %v1759
  %v2336 = vadd.f32 %v2333, %v1760
  %v2337 = vadd.f32 %v2334, %v1761
  %s2338 = scalar_lea.vmem %s3, 24
  %2339 = vst [vmem:[%s2338] sm:$0xff] %v2335
  %2340 = vst [vmem:[%s2338 + $0x8] sm:$0xff] %v2336
  %2341 = vst [vmem:[%s2338 + $0x10] sm:$0xff] %v2337
  // Predicated region
  $region14: #{forward.1} parent=0 // pred_check
    _
  $region15: #{forward.1} parent=0 // pred_check_branch
    %2343 = sbr.rel (0) target = $region17
  $region16: #{forward.1} parent=0 // pred_region
    _
  $region17: #{forward.1} parent=0 // pred_fallthru
    _
  // Predicated region
  $region18: #{forward.1} parent=0 // pred_check
    _
  $region19: #{forward.1} parent=0 // pred_check_branch
    %2345 = sbr.rel (0) target = $region21
  $region20: #{forward.1} parent=0 // pred_region
    _
  $region21: #{forward.1} parent=0 // pred_fallthru
    _

</llo_original>
